<compile_context>
chip_gen: v6e
topology: v6e:2x2x1
jax: 0.10.0
libtpu: 0.0.40
codegen_flags: <defaults>
</compile_context>

<pallas_src>
import functools

import numpy as np
import jax
import jax.numpy as jnp
from jax.experimental import pallas as pl
from jax.experimental.pallas import tpu as pltpu

NEG_SLOPE = 0.1                      # cfg.MODEL.FLOW_NET.NEGATIVE_SLOPE
PIXEL_MEAN = (0.45, 0.432, 0.411)    # cfg.MODEL.FLOW_NET.PIXEL_MEAN
PIXEL_STD = (1.0, 1.0, 1.0)          # cfg.MODEL.FLOW_NET.PIXEL_STD

# [name | type | in_chs | out_chs | kernel | stride | pad | act]
NET_ARGS = [
    ['conv1', 'conv', 6, 64, 7, 2, 3, True],
    ['conv2', 'conv', 64, 128, 5, 2, 2, True],
    ['conv3', 'conv', 128, 256, 5, 2, 2, True],
    ['conv3_1', 'conv', 256, 256, 3, 1, 1, True],
    ['conv4', 'conv', 256, 512, 3, 2, 1, True],
    ['conv4_1', 'conv', 512, 512, 3, 1, 1, True],
    ['conv5', 'conv', 512, 512, 3, 2, 1, True],
    ['conv5_1', 'conv', 512, 512, 3, 1, 1, True],
    ['conv6', 'conv', 512, 1024, 3, 2, 1, True],
    ['conv6_1', 'conv', 1024, 1024, 3, 1, 1, True],
    ['deconv5', 'deconv', 1024, 512, 4, 2, 1, True],
    ['deconv4', 'deconv', 1026, 256, 4, 2, 1, True],
    ['deconv3', 'deconv', 770, 128, 4, 2, 1, True],
    ['deconv2', 'deconv', 386, 64, 4, 2, 1, True],
    ['upsample_flow6to5', 'deconv', 2, 2, 4, 2, 1, False],
    ['upsample_flow5to4', 'deconv', 2, 2, 4, 2, 1, False],
    ['upsample_flow4to3', 'deconv', 2, 2, 4, 2, 1, False],
    ['upsample_flow3to2', 'deconv', 2, 2, 4, 2, 1, False],
    ['pred6', 'conv', 1024, 2, 3, 1, 1, False],
    ['pred5', 'conv', 1026, 2, 3, 1, 1, False],
    ['pred4', 'conv', 770, 2, 3, 1, 1, False],
    ['pred3', 'conv', 386, 2, 3, 1, 1, False],
    ['pred2', 'conv', 194, 2, 3, 1, 1, False],
]

LANE = 128                               # MXU / vreg lane width
TN_MAX = 512                             # output-channel tile cap
TM_MIN = 256
TM_MAX = 4096
A_BLOCK_BYTES = 4 * 1024 * 1024          # target bf16 A-block size per buffer
VMEM_LIMIT_BYTES = 48 * 1024 * 1024      # safe on v5e/v6e (128 MiB) and v7x (64 MiB)
FUSED_VMEM_BUDGET = 32 * 1024 * 1024     # fused whole-image kernel budget (else fall back)


def _round_up(x, m):
    return ((x + m - 1) // m) * m


def _pick_tn(cout_p):
    """Largest 128-multiple tile <= 512 that divides the padded Cout."""
    if cout_p <= TN_MAX:
        return cout_p
    for d in (512, 384, 256, 128):
        if cout_p % d == 0:
            return d
    return LANE


def _pick_tm(m, kp):
    """Scale the M tile with per-step MXU work: ~4 MiB of bf16 A per buffer."""
    cap = (A_BLOCK_BYTES // (2 * kp)) // 256 * 256
    cap = max(TM_MIN, min(TM_MAX, cap))
    return m if m <= cap else cap


# ---------------- Pallas kernel 1: single-K-block matmul + bias + LeakyReLU ------------
# A (M, Kp) bf16 @ W (Kp, Np) bf16 + bias (1, Np) f32 -> bf16, f32 accumulation on MXU.

def _matmul_bias_act_kernel(a_ref, w_ref, b_ref, o_ref, *, slope, apply_act):
    y = jnp.dot(a_ref[...], w_ref[...], preferred_element_type=jnp.float32) + b_ref[...]
    if apply_act:
        y = jnp.where(y > 0.0, y, y * slope)
    o_ref[...] = y.astype(o_ref.dtype)


def matmul_bias_act(a, w, b, *, apply_act, slope=NEG_SLOPE, out_dtype=jnp.bfloat16):
    m, kp = a.shape
    kp2, cout_p = w.shape
    assert kp == kp2 and b.shape == (1, cout_p)
    tn = _pick_tn(cout_p)
    tm = _pick_tm(m, kp)
    grid = (cout_p // tn, pl.cdiv(m, tm))     # (j, i): weight block resident over the i sweep
    kernel = functools.partial(_matmul_bias_act_kernel, slope=slope, apply_act=apply_act)
    return pl.pallas_call(
        kernel,
        out_shape=jax.ShapeDtypeStruct((m, cout_p), out_dtype),
        grid_spec=pltpu.PrefetchScalarGridSpec(
            num_scalar_prefetch=0,
            grid=grid,
            in_specs=[
                pl.BlockSpec((tm, kp), lambda j, i: (i, 0)),
                pl.BlockSpec((kp, tn), lambda j, i: (0, j)),
                pl.BlockSpec((1, tn), lambda j, i: (0, j)),
            ],
            out_specs=pl.BlockSpec((tm, tn), lambda j, i: (i, j)),
        ),
        compiler_params=pltpu.CompilerParams(
            dimension_semantics=("parallel", "parallel"),
            vmem_limit_bytes=VMEM_LIMIT_BYTES,
        ),
    )(a, w, b)


# ---------------- Pallas kernel 2: fused stride-1 3x3 conv (tap accumulation) ----------
# x block: (Hp, Wp_k, Cin_p) padded image; w block: (9, Cin_p, tn); 9 shifted matmuls are
# accumulated in f32 inside the kernel -> no im2col patch matrix in HBM.

def _conv3x3_tap_kernel(x_ref, w_ref, b_ref, o_ref, *, out_h, out_w, slope, apply_act):
    cin = x_ref.shape[-1]
    acc = None
    for tap in range(9):
        r, c = divmod(tap, 3)
        win = x_ref[r:r + out_h, c:c + out_w, :].reshape(out_h * out_w, cin)
        part = jnp.dot(win, w_ref[tap], preferred_element_type=jnp.float32)
        acc = part if acc is None else acc + part
    y = acc + b_ref[...]
    if apply_act:
        y = jnp.where(y > 0.0, y, y * slope)
    o_ref[...] = y.astype(o_ref.dtype)


def _fused_vmem_bytes(hp, wpk, cin_p, h, wk, tn):
    x_b = hp * wpk * cin_p * 2
    w_b = 9 * cin_p * tn * 2
    o_b = h * wk * tn * 2
    acc_b = h * wk * tn * 4
    win_b = h * wk * cin_p * 2
    return 2 * (x_b + w_b + o_b) + acc_b + 2 * win_b


def _conv3x3_fused(x, p):
    """x: (N, H, W, C) -> (N, H, W, Np) bf16 via fused tap-accumulation kernel."""
    n, h, w, c = x.shape
    cin_p, cout_p = p['Cin_p'], p['Np']
    tn = _pick_tn(cout_p)
    wk = _round_up(w, 16)          # bf16 sublane-tile aligned in-kernel width
    hp, wpk = h + 2, wk + 2
    if _fused_vmem_bytes(hp, wpk, cin_p, h, wk, tn) > FUSED_VMEM_BUDGET:
        # TODO(synk): row-halo tiling instead of this im2col fallback for huge activations.
        return _conv3x3_im2col(x, p)
    xp = jnp.pad(x.astype(jnp.bfloat16),
                 ((0, 0), (1, 1), (1, 1 + wk - w), (0, cin_p - c)))
    kernel = functools.partial(_conv3x3_tap_kernel, out_h=h, out_w=wk,
                               slope=NEG_SLOPE, apply_act=p['act'])
    out = pl.pallas_call(
        kernel,
        out_shape=jax.ShapeDtypeStruct((n, h * wk, cout_p), jnp.bfloat16),
        grid_spec=pltpu.PrefetchScalarGridSpec(
            num_scalar_prefetch=0,
            grid=(cout_p // tn, n),      # (j, image): weight block resident across images
            in_specs=[
                pl.BlockSpec((None, hp, wpk, cin_p), lambda j, b: (b, 0, 0, 0)),
                pl.BlockSpec((9, cin_p, tn), lambda j, b: (0, 0, j)),
                pl.BlockSpec((1, tn), lambda j, b: (0, j)),
            ],
            out_specs=pl.BlockSpec((None, h * wk, tn), lambda j, b: (b, 0, j)),
        ),
        compiler_params=pltpu.CompilerParams(
            dimension_semantics=("parallel", "parallel"),
            vmem_limit_bytes=VMEM_LIMIT_BYTES,
        ),
    )(xp, p['w9'], p['b'])
    out = out.reshape(n, h, wk, cout_p)
    return out[:, :, :w, :]


def _conv3x3_im2col(x, p):
    """Fallback for 3x3 stride-1 layers whose whole image does not fit VMEM."""
    n, h, w, c = x.shape
    cin_p = p['Cin_p']
    xp = jnp.pad(x.astype(jnp.bfloat16), ((0, 0), (1, 1), (1, 1), (0, cin_p - c)))
    cols = [xp[:, r:r + h, s:s + w, :] for r in range(3) for s in range(3)]
    patches = jnp.concatenate(cols, axis=-1).reshape(n * h * w, 9 * cin_p)
    w2 = p['w9'].reshape(9 * cin_p, p['Np'])
    y = matmul_bias_act(patches, w2, p['b'], apply_act=p['act'])
    return y.reshape(n, h, w, -1)


def _conv_im2col(x, p):
    """Strided encoder convs (conv1..conv6): im2col + single-K-block Pallas matmul."""
    x = x.astype(jnp.bfloat16)
    kh, kw, stride, pad = p['kh'], p['kw'], p['stride'], p['pad']
    xp = jnp.pad(x, ((0, 0), (pad, pad), (pad, pad), (0, 0)))
    n, hpad, wpad, c = xp.shape
    ho = (hpad - kh) // stride + 1
    wo = (wpad - kw) // stride + 1
    cols = []
    for i in range(kh):
        for j in range(kw):
            cols.append(xp[:, i:i + ho * stride:stride, j:j + wo * stride:stride, :])
    k_extra = p['Kp'] - p['K']
    if k_extra:   # fold the K padding into the same concatenate (no extra HBM round trip)
        cols.append(jnp.zeros((n, ho, wo, k_extra), jnp.bfloat16))
    patches = jnp.concatenate(cols, axis=-1).reshape(n * ho * wo, p['Kp'])
    y = matmul_bias_act(patches, p['w'], p['b'], apply_act=p['act'])
    return y.reshape(n, ho, wo, -1)


def apply_layer(p, x):
    y = _conv3x3_fused(x, p) if p['fused'] else _conv_im2col(x, p)
    y = y[..., :p['conv_cout']]
    if p['type'] == 'deconv':
        # pixel shuffle: channel blocks are ordered (ph, pw, cout)
        n, h, w, _ = y.shape
        c = p['cout']
        y = y.reshape(n, h, w, 2, 2, c)
        y = jnp.transpose(y, (0, 1, 3, 2, 4, 5)).reshape(n, 2 * h, 2 * w, c)
    return y


def crop_like(x, target):
    """NHWC analogue of the NCHW crop_like in the reference."""
    if x.shape[1:3] == target.shape[1:3]:
        return x
    return x[:, :target.shape[1], :target.shape[2], :]


# ---------------- parameter packing ----------------------------------------------------

def _pack_fused3x3(w, bias):
    """w: (3, 3, Cin, Cf) f32 -> tap-major (9, Cin_p, Np) bf16 weight + padded f32 bias."""
    _, _, cin, cf = w.shape
    cin_p = _round_up(max(cin, 1), LANE)
    cout_p = _round_up(cf, LANE)
    w9 = jnp.pad(w.reshape(9, cin, cf).astype(jnp.float32),
                 ((0, 0), (0, cin_p - cin), (0, cout_p - cf))).astype(jnp.bfloat16)
    b2 = jnp.pad(bias.astype(jnp.float32).reshape(1, -1), ((0, 0), (0, cout_p - cf)))
    return dict(w9=w9, b=b2, Cin_p=cin_p, Np=cout_p, conv_cout=cf,
                fused=True, kh=3, kw=3, stride=1, pad=1)


def _pack_im2col(w, bias):
    """w: (KH, KW, Cin, Cf) f32 -> (Kp, Np) bf16 matmul weight with Kp 128-aligned."""
    kh, kw, cin, cf = w.shape
    K = kh * kw * cin
    Kp = _round_up(K, LANE)
    cout_p = _round_up(cf, LANE)
    w2 = jnp.pad(w.reshape(K, cf).astype(jnp.float32),
                 ((0, Kp - K), (0, cout_p - cf))).astype(jnp.bfloat16)
    b2 = jnp.pad(bias.astype(jnp.float32).reshape(1, -1), ((0, 0), (0, cout_p - cf)))
    return dict(w=w2, b=b2, K=K, Kp=Kp, Np=cout_p, conv_cout=cf,
                fused=False, kh=kh, kw=kw)


def _convtranspose_to_conv3x3(wt):
    """PyTorch ConvTranspose2d(k=4, s=2, p=1) weight (Cin, Cout, 4, 4) ->
    equivalent stride-1 pad-1 3x3 conv kernel (3, 3, Cin, 4*Cout), one Cout block per
    output sub-pixel phase (ph, pw).  Spatial flip / channel swap handled here."""
    cin, cout = wt.shape[0], wt.shape[1]
    k3 = jnp.zeros((3, 3, cin, 2, 2, cout), jnp.float32)
    # phase -> ((conv row/col offset, transposed-conv tap index), ...)
    taps = {0: ((0, 3), (1, 1)), 1: ((1, 2), (2, 0))}
    for ph in (0, 1):
        for pw in (0, 1):
            for r, kh in taps[ph]:
                for c, kw in taps[pw]:
                    k3 = k3.at[r, c, :, ph, pw, :].set(wt[:, :, kh, kw])
    return k3.reshape(3, 3, cin, 4 * cout)


def make_conv_layer(w, bias, stride, pad, act):
    kh, kw, _, cout = w.shape
    if stride == 1 and pad == 1 and kh == 3 and kw == 3:
        d = _pack_fused3x3(w, bias)
    else:
        d = _pack_im2col(w, bias)
        d.update(stride=stride, pad=pad)
    d.update(type='conv', act=act, cout=cout)
    return d


def make_deconv_layer(wt, bias, act):
    """wt: (Cin, Cout, 4, 4) PyTorch ConvTranspose2d(k=4, s=2, p=1) weight."""
    cout = wt.shape[1]
    d = _pack_fused3x3(_convtranspose_to_conv3x3(wt), jnp.tile(bias, 4))
    d.update(type='deconv', act=act, cout=cout)
    return d


def init_params(key):
    """Deterministic synthetic init (c2_msra_fill-like; biases are zero)."""
    params = {}
    for name, ctype, cin, cout, k, s, p, act in NET_ARGS:
        key, wk = jax.random.split(key)
        std = (2.0 / (cout * k * k)) ** 0.5
        b = jnp.zeros((cout,), jnp.float32)
        if ctype == 'conv':
            w = std * jax.random.normal(wk, (k, k, cin, cout), jnp.float32)
            params[name] = make_conv_layer(w, b, s, p, act)
        else:
            assert (k, s, p) == (4, 2, 1)
            wt = std * jax.random.normal(wk, (cin, cout, k, k), jnp.float32)
            params[name] = make_deconv_layer(wt, b, act)
    return params


# ---------------- FlowNetS forward -----------------------------------------------------

def preprocess_images(images_nchw):
    """images_nchw: (N, 6, H, W) raw pixel values in [0, 255]."""
    mean = jnp.tile(jnp.asarray(PIXEL_MEAN, jnp.float32), 2).reshape(1, 6, 1, 1)
    std = jnp.tile(jnp.asarray(PIXEL_STD, jnp.float32), 2).reshape(1, 6, 1, 1)
    return (images_nchw / 255.0 - mean) / std


def flownets_forward_layers(params, images_nchw):
    """Mirrors FlowNetS.forward_layers; returns (flow2..flow6) in NCHW float32."""
    run = lambda name, t: apply_layer(params[name], t)
    x = jnp.transpose(images_nchw, (0, 2, 3, 1))           # NCHW -> NHWC

    out_conv2 = run('conv2', run('conv1', x))
    out_conv3 = run('conv3_1', run('conv3', out_conv2))
    out_conv4 = run('conv4_1', run('conv4', out_conv3))
    out_conv5 = run('conv5_1', run('conv5', out_conv4))
    out_conv6 = run('conv6_1', run('conv6', out_conv5))

    flow6 = run('pred6', out_conv6)
    flow6_up = crop_like(run('upsample_flow6to5', flow6), out_conv5)
    out_deconv5 = crop_like(run('deconv5', out_conv6), out_conv5)
    concat5 = jnp.concatenate((out_conv5, out_deconv5, flow6_up), axis=-1)

    flow5 = run('pred5', concat5)
    flow5_up = crop_like(run('upsample_flow5to4', flow5), out_conv4)
    out_deconv4 = crop_like(run('deconv4', concat5), out_conv4)
    concat4 = jnp.concatenate((out_conv4, out_deconv4, flow5_up), axis=-1)

    flow4 = run('pred4', concat4)
    flow4_up = crop_like(run('upsample_flow4to3', flow4), out_conv3)
    out_deconv3 = crop_like(run('deconv3', concat4), out_conv3)
    concat3 = jnp.concatenate((out_conv3, out_deconv3, flow4_up), axis=-1)

    flow3 = run('pred3', concat3)
    flow3_up = crop_like(run('upsample_flow3to2', flow3), out_conv2)
    out_deconv2 = crop_like(run('deconv2', concat3), out_conv2)
    concat2 = jnp.concatenate((out_conv2, out_deconv2, flow3_up), axis=-1)

    flow2 = run('pred2', concat2)

    to_nchw = lambda t: jnp.transpose(t, (0, 3, 1, 2)).astype(jnp.float32)
    return tuple(to_nchw(f) for f in (flow2, flow3, flow4, flow5, flow6))

# TODO(synk): training losses (multiscale EPE / EventStorage), visualization, and the
#             per-sample bilinear inference postprocessing operate on host-side lists of
#             dicts and are not part of the kernel hot path; not implemented here.


# ---------------- reference (numpy) ConvTranspose2d, used only for a self-check --------

def _deconv_transpose_ref_np(x, wt, b, stride=2, pad=1):
    """Direct-from-definition ConvTranspose2d. x: (N,H,W,Cin), wt: (Cin,Cout,K,K)."""
    x = np.asarray(x, np.float32)
    wt = np.asarray(wt, np.float32)
    b = np.asarray(b, np.float32)
    n, h, w, _ = x.shape
    co, k = wt.shape[1], wt.shape[2]
    ho, wo = (h - 1) * stride - 2 * pad + k, (w - 1) * stride - 2 * pad + k
    out = np.zeros((n, ho, wo, co), np.float32)
    for ih in range(h):
        for iw in range(w):
            for kh in range(k):
                for kw in range(k):
                    oh, ow = ih * stride - pad + kh, iw * stride - pad + kw
                    if 0 <= oh < ho and 0 <= ow < wo:
                        out[:, oh, ow, :] += x[:, ih, iw, :] @ wt[:, :, kh, kw]
    return out + b


if __name__ == "__main__":
    key = jax.random.PRNGKey(0)
    pkey, ikey, ck = jax.random.split(key, 3)

    # --- self-check: deconv-as-(fused 3x3 conv + pixel shuffle) vs. direct ConvTranspose2d
    k1, k2, k3 = jax.random.split(ck, 3)
    wt = 0.25 * jax.random.normal(k1, (2, 3, 4, 4), jnp.float32)
    bt = 0.1 * jax.random.normal(k2, (3,), jnp.float32)
    xt = jax.random.normal(k3, (1, 3, 3, 2), jnp.float32)
    got = jax.block_until_ready(apply_layer(make_deconv_layer(wt, bt, act=False), xt))
    want = _deconv_transpose_ref_np(xt, wt, bt)
    assert got.shape == want.shape, (got.shape, want.shape)
    assert float(np.max(np.abs(np.asarray(got, np.float32) - want))) < 5e-2

    # --- full forward at a small resolution ---------------------------------------------
    params = init_params(pkey)
    images = jax.random.uniform(ikey, (2, 6, 64, 64), jnp.float32, 0.0, 255.0)

    fwd = jax.jit(lambda imgs: flownets_forward_layers(params, preprocess_images(imgs)))
    flows = jax.block_until_ready(fwd(images))

    expected = [(2, 2, 16, 16), (2, 2, 8, 8), (2, 2, 4, 4), (2, 2, 2, 2), (2, 2, 1, 1)]
    assert [tuple(f.shape) for f in flows] == expected, [f.shape for f in flows]
    assert all(bool(jnp.all(jnp.isfinite(f))) for f in flows)

    print("KERNEL_OK")
</pallas_src>

<mosaic_0001>
module attributes {stable_mosaic.version = 11 : i64} {
  func.func @_conv3x3_tap_kernel(%arg0: i32, %arg1: i32, %arg2: memref<1x5x18x128xbf16, #tpu.memory_space<vmem>>, %arg3: memref<9x128x128xbf16, #tpu.memory_space<vmem>>, %arg4: memref<1x128xf32, #tpu.memory_space<vmem>>, %arg5: memref<1x48x128xbf16, #tpu.memory_space<vmem>>) attributes {dimension_semantics = [#tpu.dimension_semantics<parallel>, #tpu.dimension_semantics<parallel>], iteration_bounds = array<i64: 1, 1>, scalar_prefetch = 0 : i64, scratch_operands = 0 : i64, tpu.core_type = #tpu.core_type<tc>, window_params = [{transform_indices = @transform_0, window_bounds = array<i64: 1, 5, 18, 128>}, {transform_indices = @transform_1, window_bounds = array<i64: 9, 128, 128>}, {transform_indices = @transform_2, window_bounds = array<i64: 1, 128>}, {transform_indices = @transform_3, window_bounds = array<i64: 1, 48, 128>}]} {
    %c0 = arith.constant 0 : index
    %c0_0 = arith.constant 0 : index
    %c0_1 = arith.constant 0 : index
    %c0_2 = arith.constant 0 : index
    %0 = vector.load %arg2[%c0, %c0_0, %c0_1, %c0_2] : memref<1x5x18x128xbf16, #tpu.memory_space<vmem>>, vector<1x3x16x128xbf16>
    %1 = vector.shape_cast %0 : vector<1x3x16x128xbf16> to vector<3x16x128xbf16>
    %2 = vector.shape_cast %1 : vector<3x16x128xbf16> to vector<48x128xbf16>
    %c0_3 = arith.constant 0 : index
    %c0_4 = arith.constant 0 : index
    %c0_5 = arith.constant 0 : index
    %3 = vector.load %arg3[%c0_3, %c0_4, %c0_5] : memref<9x128x128xbf16, #tpu.memory_space<vmem>>, vector<1x128x128xbf16>
    %4 = vector.shape_cast %3 : vector<1x128x128xbf16> to vector<128x128xbf16>
    %cst = arith.constant dense<0.000000e+00> : vector<48x128xf32>
    %5 = tpu.matmul %2, %4, %cst {dimension_numbers = #tpu.dot_dimension_numbers<[1], [0], [0], [1], [0, 0, 1, 1], [], []>} : vector<48x128xbf16>, vector<128x128xbf16>, vector<48x128xf32> -> vector<48x128xf32>
    %c0_6 = arith.constant 0 : index
    %c0_7 = arith.constant 0 : index
    %c1 = arith.constant 1 : index
    %c0_8 = arith.constant 0 : index
    %6 = vector.load %arg2[%c0_6, %c0_7, %c1, %c0_8] : memref<1x5x18x128xbf16, #tpu.memory_space<vmem>>, vector<1x3x16x128xbf16>
    %7 = vector.shape_cast %6 : vector<1x3x16x128xbf16> to vector<3x16x128xbf16>
    %8 = vector.shape_cast %7 : vector<3x16x128xbf16> to vector<48x128xbf16>
    %c1_9 = arith.constant 1 : index
    %c0_10 = arith.constant 0 : index
    %c0_11 = arith.constant 0 : index
    %9 = vector.load %arg3[%c1_9, %c0_10, %c0_11] : memref<9x128x128xbf16, #tpu.memory_space<vmem>>, vector<1x128x128xbf16>
    %10 = vector.shape_cast %9 : vector<1x128x128xbf16> to vector<128x128xbf16>
    %cst_12 = arith.constant dense<0.000000e+00> : vector<48x128xf32>
    %11 = tpu.matmul %8, %10, %cst_12 {dimension_numbers = #tpu.dot_dimension_numbers<[1], [0], [0], [1], [0, 0, 1, 1], [], []>} : vector<48x128xbf16>, vector<128x128xbf16>, vector<48x128xf32> -> vector<48x128xf32>
    %12 = arith.addf %5, %11 : vector<48x128xf32>
    %c0_13 = arith.constant 0 : index
    %c0_14 = arith.constant 0 : index
    %c2 = arith.constant 2 : index
    %c0_15 = arith.constant 0 : index
    %13 = vector.load %arg2[%c0_13, %c0_14, %c2, %c0_15] : memref<1x5x18x128xbf16, #tpu.memory_space<vmem>>, vector<1x3x16x128xbf16>
    %14 = vector.shape_cast %13 : vector<1x3x16x128xbf16> to vector<3x16x128xbf16>
    %15 = vector.shape_cast %14 : vector<3x16x128xbf16> to vector<48x128xbf16>
    %c2_16 = arith.constant 2 : index
    %c0_17 = arith.constant 0 : index
    %c0_18 = arith.constant 0 : index
    %16 = vector.load %arg3[%c2_16, %c0_17, %c0_18] : memref<9x128x128xbf16, #tpu.memory_space<vmem>>, vector<1x128x128xbf16>
    %17 = vector.shape_cast %16 : vector<1x128x128xbf16> to vector<128x128xbf16>
    %cst_19 = arith.constant dense<0.000000e+00> : vector<48x128xf32>
    %18 = tpu.matmul %15, %17, %cst_19 {dimension_numbers = #tpu.dot_dimension_numbers<[1], [0], [0], [1], [0, 0, 1, 1], [], []>} : vector<48x128xbf16>, vector<128x128xbf16>, vector<48x128xf32> -> vector<48x128xf32>
    %19 = arith.addf %12, %18 : vector<48x128xf32>
    %c0_20 = arith.constant 0 : index
    %c1_21 = arith.constant 1 : index
    %c0_22 = arith.constant 0 : index
    %c0_23 = arith.constant 0 : index
    %20 = vector.load %arg2[%c0_20, %c1_21, %c0_22, %c0_23] : memref<1x5x18x128xbf16, #tpu.memory_space<vmem>>, vector<1x3x16x128xbf16>
    %21 = vector.shape_cast %20 : vector<1x3x16x128xbf16> to vector<3x16x128xbf16>
    %22 = vector.shape_cast %21 : vector<3x16x128xbf16> to vector<48x128xbf16>
    %c3 = arith.constant 3 : index
    %c0_24 = arith.constant 0 : index
    %c0_25 = arith.constant 0 : index
    %23 = vector.load %arg3[%c3, %c0_24, %c0_25] : memref<9x128x128xbf16, #tpu.memory_space<vmem>>, vector<1x128x128xbf16>
    %24 = vector.shape_cast %23 : vector<1x128x128xbf16> to vector<128x128xbf16>
    %cst_26 = arith.constant dense<0.000000e+00> : vector<48x128xf32>
    %25 = tpu.matmul %22, %24, %cst_26 {dimension_numbers = #tpu.dot_dimension_numbers<[1], [0], [0], [1], [0, 0, 1, 1], [], []>} : vector<48x128xbf16>, vector<128x128xbf16>, vector<48x128xf32> -> vector<48x128xf32>
    %26 = arith.addf %19, %25 : vector<48x128xf32>
    %c0_27 = arith.constant 0 : index
    %c1_28 = arith.constant 1 : index
    %c1_29 = arith.constant 1 : index
    %c0_30 = arith.constant 0 : index
    %27 = vector.load %arg2[%c0_27, %c1_28, %c1_29, %c0_30] : memref<1x5x18x128xbf16, #tpu.memory_space<vmem>>, vector<1x3x16x128xbf16>
    %28 = vector.shape_cast %27 : vector<1x3x16x128xbf16> to vector<3x16x128xbf16>
    %29 = vector.shape_cast %28 : vector<3x16x128xbf16> to vector<48x128xbf16>
    %c4 = arith.constant 4 : index
    %c0_31 = arith.constant 0 : index
    %c0_32 = arith.constant 0 : index
    %30 = vector.load %arg3[%c4, %c0_31, %c0_32] : memref<9x128x128xbf16, #tpu.memory_space<vmem>>, vector<1x128x128xbf16>
    %31 = vector.shape_cast %30 : vector<1x128x128xbf16> to vector<128x128xbf16>
    %cst_33 = arith.constant dense<0.000000e+00> : vector<48x128xf32>
    %32 = tpu.matmul %29, %31, %cst_33 {dimension_numbers = #tpu.dot_dimension_numbers<[1], [0], [0], [1], [0, 0, 1, 1], [], []>} : vector<48x128xbf16>, vector<128x128xbf16>, vector<48x128xf32> -> vector<48x128xf32>
    %33 = arith.addf %26, %32 : vector<48x128xf32>
    %c0_34 = arith.constant 0 : index
    %c1_35 = arith.constant 1 : index
    %c2_36 = arith.constant 2 : index
    %c0_37 = arith.constant 0 : index
    %34 = vector.load %arg2[%c0_34, %c1_35, %c2_36, %c0_37] : memref<1x5x18x128xbf16, #tpu.memory_space<vmem>>, vector<1x3x16x128xbf16>
    %35 = vector.shape_cast %34 : vector<1x3x16x128xbf16> to vector<3x16x128xbf16>
    %36 = vector.shape_cast %35 : vector<3x16x128xbf16> to vector<48x128xbf16>
    %c5 = arith.constant 5 : index
    %c0_38 = arith.constant 0 : index
    %c0_39 = arith.constant 0 : index
    %37 = vector.load %arg3[%c5, %c0_38, %c0_39] : memref<9x128x128xbf16, #tpu.memory_space<vmem>>, vector<1x128x128xbf16>
    %38 = vector.shape_cast %37 : vector<1x128x128xbf16> to vector<128x128xbf16>
    %cst_40 = arith.constant dense<0.000000e+00> : vector<48x128xf32>
    %39 = tpu.matmul %36, %38, %cst_40 {dimension_numbers = #tpu.dot_dimension_numbers<[1], [0], [0], [1], [0, 0, 1, 1], [], []>} : vector<48x128xbf16>, vector<128x128xbf16>, vector<48x128xf32> -> vector<48x128xf32>
    %40 = arith.addf %33, %39 : vector<48x128xf32>
    %c0_41 = arith.constant 0 : index
    %c2_42 = arith.constant 2 : index
    %c0_43 = arith.constant 0 : index
    %c0_44 = arith.constant 0 : index
    %41 = vector.load %arg2[%c0_41, %c2_42, %c0_43, %c0_44] : memref<1x5x18x128xbf16, #tpu.memory_space<vmem>>, vector<1x3x16x128xbf16>
    %42 = vector.shape_cast %41 : vector<1x3x16x128xbf16> to vector<3x16x128xbf16>
    %43 = vector.shape_cast %42 : vector<3x16x128xbf16> to vector<48x128xbf16>
    %c6 = arith.constant 6 : index
    %c0_45 = arith.constant 0 : index
    %c0_46 = arith.constant 0 : index
    %44 = vector.load %arg3[%c6, %c0_45, %c0_46] : memref<9x128x128xbf16, #tpu.memory_space<vmem>>, vector<1x128x128xbf16>
    %45 = vector.shape_cast %44 : vector<1x128x128xbf16> to vector<128x128xbf16>
    %cst_47 = arith.constant dense<0.000000e+00> : vector<48x128xf32>
    %46 = tpu.matmul %43, %45, %cst_47 {dimension_numbers = #tpu.dot_dimension_numbers<[1], [0], [0], [1], [0, 0, 1, 1], [], []>} : vector<48x128xbf16>, vector<128x128xbf16>, vector<48x128xf32> -> vector<48x128xf32>
    %47 = arith.addf %40, %46 : vector<48x128xf32>
    %c0_48 = arith.constant 0 : index
    %c2_49 = arith.constant 2 : index
    %c1_50 = arith.constant 1 : index
    %c0_51 = arith.constant 0 : index
    %48 = vector.load %arg2[%c0_48, %c2_49, %c1_50, %c0_51] : memref<1x5x18x128xbf16, #tpu.memory_space<vmem>>, vector<1x3x16x128xbf16>
    %49 = vector.shape_cast %48 : vector<1x3x16x128xbf16> to vector<3x16x128xbf16>
    %50 = vector.shape_cast %49 : vector<3x16x128xbf16> to vector<48x128xbf16>
    %c7 = arith.constant 7 : index
    %c0_52 = arith.constant 0 : index
    %c0_53 = arith.constant 0 : index
    %51 = vector.load %arg3[%c7, %c0_52, %c0_53] : memref<9x128x128xbf16, #tpu.memory_space<vmem>>, vector<1x128x128xbf16>
    %52 = vector.shape_cast %51 : vector<1x128x128xbf16> to vector<128x128xbf16>
    %cst_54 = arith.constant dense<0.000000e+00> : vector<48x128xf32>
    %53 = tpu.matmul %50, %52, %cst_54 {dimension_numbers = #tpu.dot_dimension_numbers<[1], [0], [0], [1], [0, 0, 1, 1], [], []>} : vector<48x128xbf16>, vector<128x128xbf16>, vector<48x128xf32> -> vector<48x128xf32>
    %54 = arith.addf %47, %53 : vector<48x128xf32>
    %c0_55 = arith.constant 0 : index
    %c2_56 = arith.constant 2 : index
    %c2_57 = arith.constant 2 : index
    %c0_58 = arith.constant 0 : index
    %55 = vector.load %arg2[%c0_55, %c2_56, %c2_57, %c0_58] : memref<1x5x18x128xbf16, #tpu.memory_space<vmem>>, vector<1x3x16x128xbf16>
    %56 = vector.shape_cast %55 : vector<1x3x16x128xbf16> to vector<3x16x128xbf16>
    %57 = vector.shape_cast %56 : vector<3x16x128xbf16> to vector<48x128xbf16>
    %c8 = arith.constant 8 : index
    %c0_59 = arith.constant 0 : index
    %c0_60 = arith.constant 0 : index
    %58 = vector.load %arg3[%c8, %c0_59, %c0_60] : memref<9x128x128xbf16, #tpu.memory_space<vmem>>, vector<1x128x128xbf16>
    %59 = vector.shape_cast %58 : vector<1x128x128xbf16> to vector<128x128xbf16>
    %cst_61 = arith.constant dense<0.000000e+00> : vector<48x128xf32>
    %60 = tpu.matmul %57, %59, %cst_61 {dimension_numbers = #tpu.dot_dimension_numbers<[1], [0], [0], [1], [0, 0, 1, 1], [], []>} : vector<48x128xbf16>, vector<128x128xbf16>, vector<48x128xf32> -> vector<48x128xf32>
    %61 = arith.addf %54, %60 : vector<48x128xf32>
    %c0_62 = arith.constant 0 : index
    %c0_63 = arith.constant 0 : index
    %62 = vector.load %arg4[%c0_62, %c0_63] : memref<1x128xf32, #tpu.memory_space<vmem>>, vector<1x128xf32>
    %63 = vector.broadcast %62 : vector<1x128xf32> to vector<48x128xf32>
    %64 = arith.addf %61, %63 : vector<48x128xf32>
    %65 = arith.truncf %64 : vector<48x128xf32> to vector<48x128xbf16>
    %c0_64 = arith.constant 0 : index
    %c0_65 = arith.constant 0 : index
    %c0_66 = arith.constant 0 : index
    %66 = vector.load %arg5[%c0_64, %c0_65, %c0_66] : memref<1x48x128xbf16, #tpu.memory_space<vmem>>, vector<1x48x128xbf16>
    %67 = vector.shape_cast %66 : vector<1x48x128xbf16> to vector<48x128xbf16>
    %68 = vector.shape_cast %65 : vector<48x128xbf16> to vector<1x48x128xbf16>
    tpu.vector_store %arg5[%c0_64, %c0_65, %c0_66], %68 {strides = array<i32>} : memref<1x48x128xbf16, #tpu.memory_space<vmem>>, vector<1x48x128xbf16>,
    return
  }
  func.func @transform_0(%arg0: i32, %arg1: i32) -> (i32, i32, i32, i32) {
    %c0_i32 = arith.constant 0 : i32
    %c0_i32_0 = arith.constant 0 : i32
    %c0_i32_1 = arith.constant 0 : i32
    %c0_i32_2 = arith.constant 0 : i32
    return %arg1, %c0_i32, %c0_i32_0, %c0_i32_1 : i32, i32, i32, i32
  }
  func.func @transform_1(%arg0: i32, %arg1: i32) -> (i32, i32, i32) {
    %c0_i32 = arith.constant 0 : i32
    %c0_i32_0 = arith.constant 0 : i32
    %c0_i32_1 = arith.constant 0 : i32
    return %c0_i32, %c0_i32_0, %arg0 : i32, i32, i32
  }
  func.func @transform_2(%arg0: i32, %arg1: i32) -> (i32, i32) {
    %c0_i32 = arith.constant 0 : i32
    %c0_i32_0 = arith.constant 0 : i32
    return %c0_i32, %arg0 : i32, i32
  }
  func.func @transform_3(%arg0: i32, %arg1: i32) -> (i32, i32, i32) {
    %c0_i32 = arith.constant 0 : i32
    %c0_i32_0 = arith.constant 0 : i32
    return %arg1, %c0_i32, %arg0 : i32, i32, i32
  }
}

</mosaic_0001>

<llo_original>
// kernel: tpu_custom_call.1
$region0: #{tpu_custom_call.1}
  #allocation0 [shape = 'u32[]', space=smem, size = 0x4, offset = 0x4, fixed_abs, tag = 'smem constant byte address 0x4 - core index']
  #allocation1 [shape = 'u32[144,128]{1,0:T(1,128)}', space=vmem, size = 0x12000, scoped, tag = 'internal scratch']
  %s0 = inlined_call_operand.hbm [shape: bf16[1,5,18,128], index: 0, kind: input, shape index: {}]
  %s1 = inlined_call_operand.hbm [shape: bf16[9,128,128], index: 1, kind: input, shape index: {}]
  %s2 = inlined_call_operand.vmem [shape: f32[1,128], index: 2, kind: input, shape index: {}]
  %s3 = inlined_call_operand.hbm [shape: bf16[1,48,128], index: 3, kind: output, shape index: {}]
  %s4 = sld [smem:[#allocation0]]
  $region30: #{tpu_custom_call.1} parent=0
    _
  %s6 = ssub.s32 1, %s4
  %s7 = scalar_select 0, %s6, %s4
  $region1: #{tpu_custom_call.1} parent=0
    #allocation2 [shape = 'u8[30720]{0}', space=vmem, size = 0x7800, scoped, tag = 'input window, operand 0, single buffered']
    #allocation3 [shape = 's32[1]{0}', space=sflag, size = 0x4, scoped, tag = 'scoped memory for tpu_custom_call.1']
    #allocation4 [shape = 's32[1]{0}', space=sflag, size = 0x4, scoped, tag = 'scoped memory for tpu_custom_call.1']
    #allocation5 [shape = 'u8[294912]{0}', space=vmem, size = 0x48000, scoped, tag = 'input window, operand 1, single buffered']
    #allocation6 [shape = 's32[1]{0}', space=sflag, size = 0x4, scoped, tag = 'scoped memory for tpu_custom_call.1']
    #allocation7 [shape = 'u8[12288]{0}', space=vmem, size = 0x3000, scoped, tag = 'output window, operand 0, single buffered']
    %8 = vsyncpa [#allocation3], 0
    %9 = vsyncpa [#allocation6], 0
    %10 = vsyncpa [#allocation4], 0
    // Predicated region
    $region2: #{tpu_custom_call.1} parent=1 // pred_check
      _
    $region3: #{tpu_custom_call.1} parent=1 // pred_check_branch
      %12 = sbr.rel (0) target = $region5
    $region4: #{tpu_custom_call.1} parent=1 // pred_region
      %s14 = ssub.s32 960, 960
      %15 = vsyncadd [#allocation3], %s14
      %s16 = sshll.u32 [#allocation2], 4
      %s17 = int_to_ptr.vmem [resolvable:$true] %s16
      %22 = dma.hbm_to_vmem [thread:$0]  %s0, 960, %s17, [#allocation3], 64, 64, 4
    $region5: #{tpu_custom_call.1} parent=1 // pred_fallthru
      _
    // Predicated region
    $region6: #{tpu_custom_call.1} parent=1 // pred_check
      _
    $region7: #{tpu_custom_call.1} parent=1 // pred_check_branch
      %24 = sbr.rel (0) target = $region9
    $region8: #{tpu_custom_call.1} parent=1 // pred_region
      %s26 = ssub.s32 9216, 9216
      %27 = vsyncadd [#allocation6], %s26
      %s28 = sshll.u32 [#allocation5], 4
      %s29 = int_to_ptr.vmem [resolvable:$true] %s28
      %34 = dma.hbm_to_vmem [thread:$0]  %s1, 9216, %s29, [#allocation6], 64, 64, 4
    $region9: #{tpu_custom_call.1} parent=1 // pred_fallthru
      _
    // Predicated region
    $region10: #{tpu_custom_call.1} parent=1 // pred_check
      _
    $region11: #{tpu_custom_call.1} parent=1 // pred_check_branch
      %36 = sbr.rel (0) target = $region13
    $region12: #{tpu_custom_call.1} parent=1 // pred_region
      _
    $region13: #{tpu_custom_call.1} parent=1 // pred_fallthru
      _
    // Predicated region
    $region14: #{tpu_custom_call.1} parent=1 // pred_check
      _
    $region15: #{tpu_custom_call.1} parent=1 // pred_check_branch
      %38 = sbr.rel (0) target = $region17
    $region16: #{tpu_custom_call.1} parent=1 // pred_region
      %39 = dma.done [#allocation3], 960
    $region17: #{tpu_custom_call.1} parent=1 // pred_fallthru
      _
    // Predicated region
    $region18: #{tpu_custom_call.1} parent=1 // pred_check
      _
    $region19: #{tpu_custom_call.1} parent=1 // pred_check_branch
      %41 = sbr.rel (0) target = $region21
    $region20: #{tpu_custom_call.1} parent=1 // pred_region
      %42 = dma.done [#allocation6], 9216
    $region21: #{tpu_custom_call.1} parent=1 // pred_fallthru
      _
    %v44 = vld [vmem:[#allocation2] sm:$0xf]
    %v45 = vld [vmem:[#allocation2 + $0x4] sm:$0xf]
    %v46 = vld [vmem:[#allocation2 + $0xc] sm:$0xf]
    %v47 = vld [vmem:[#allocation2 + $0x10] sm:$0xf]
    %v48 = vld [vmem:[#allocation2 + $0x18] sm:$0xf]
    %v49 = vld [vmem:[#allocation2 + $0x1c] sm:$0xf]
    %v50 = vld [vmem:[#allocation5] sm:$0xf]
    %v51 = vld [vmem:[#allocation5 + $0x4] sm:$0xf]
    %v52 = vld [vmem:[#allocation5 + $0x8] sm:$0xf]
    %v53 = vld [vmem:[#allocation5 + $0xc] sm:$0xf]
    %v54 = vld [vmem:[#allocation5 + $0x10] sm:$0xf]
    %v55 = vld [vmem:[#allocation5 + $0x14] sm:$0xf]
    %v56 = vld [vmem:[#allocation5 + $0x18] sm:$0xf]
    %v57 = vld [vmem:[#allocation5 + $0x1c] sm:$0xf]
    %v58 = vld [vmem:[#allocation5 + $0x20] sm:$0xf]
    %v59 = vld [vmem:[#allocation5 + $0x24] sm:$0xf]
    %v60 = vld [vmem:[#allocation5 + $0x28] sm:$0xf]
    %v61 = vld [vmem:[#allocation5 + $0x2c] sm:$0xf]
    %v62 = vld [vmem:[#allocation5 + $0x30] sm:$0xf]
    %v63 = vld [vmem:[#allocation5 + $0x34] sm:$0xf]
    %v64 = vld [vmem:[#allocation5 + $0x38] sm:$0xf]
    %v65 = vld [vmem:[#allocation5 + $0x3c] sm:$0xf]
    %v66 = vld [vmem:[#allocation2 + $0x8] sm:$0x1]
    %v67 = vld [vmem:[#allocation2 + $0x14] sm:$0x1]
    %v68 = vld [vmem:[#allocation2 + $0x20] sm:$0x1]
    %vm69 = vsmask.f32 3328
    %vm70 = vsmask.f32 7440
    %vm71 = vmor %vm69, %vm70
    %v73 = vshrl.u32 %v44, 16
    %v75 = vrot.slane %v73, 4
    %v76 = vshll.u32 %v44, 16
    %v78 = vrot.slane %v76, 5
    %v79 = vor.u32 %v75, %v78
    %v80 = vrot.slane %v79, 4
    %v82 = vshll.u32 %v45, 16
    %v84 = vrot.slane %v82, 5
    %v85 = vsel %vm71, %v80, %v84
    %v86 = vshrl.u32 %v45, 16
    %v88 = vrot.slane %v86, 4
    %v89 = vor.u32 %v88, %v84
    %v90 = vrot.slane %v89, 4
    %v92 = vshll.u32 %v66, 16
    %v94 = vrot.slane %v92, 5
    %v95 = vsel %vm71, %v90, %v94
    %v97 = vshrl.u32 %v46, 16
    %v99 = vrot.slane %v97, 4
    %v100 = vshll.u32 %v46, 16
    %v102 = vrot.slane %v100, 5
    %v103 = vor.u32 %v99, %v102
    %v104 = vrot.slane %v103, 4
    %v106 = vshll.u32 %v47, 16
    %v108 = vrot.slane %v106, 5
    %v109 = vsel %vm71, %v104, %v108
    %v110 = vshrl.u32 %v47, 16
    %v112 = vrot.slane %v110, 4
    %v113 = vor.u32 %v112, %v108
    %v114 = vrot.slane %v113, 4
    %v116 = vshll.u32 %v67, 16
    %v118 = vrot.slane %v116, 5
    %v119 = vsel %vm71, %v114, %v118
    %v121 = vshrl.u32 %v48, 16
    %v123 = vrot.slane %v121, 4
    %v124 = vshll.u32 %v48, 16
    %v126 = vrot.slane %v124, 5
    %v127 = vor.u32 %v123, %v126
    %v128 = vrot.slane %v127, 4
    %v130 = vshll.u32 %v49, 16
    %v132 = vrot.slane %v130, 5
    %v133 = vsel %vm71, %v128, %v132
    %v134 = vshrl.u32 %v49, 16
    %v136 = vrot.slane %v134, 4
    %v137 = vor.u32 %v136, %v132
    %v138 = vrot.slane %v137, 4
    %v140 = vshll.u32 %v68, 16
    %v142 = vrot.slane %v140, 5
    %v143 = vsel %vm71, %v138, %v142
    %s144 = scalar_lea.vmem [#allocation5], 64
    %v145 = vld [vmem:[%s144] sm:$0xf]
    %v146 = vld [vmem:[%s144 + $0x4] sm:$0xf]
    %v147 = vld [vmem:[%s144 + $0x8] sm:$0xf]
    %v148 = vld [vmem:[%s144 + $0xc] sm:$0xf]
    %v149 = vld [vmem:[%s144 + $0x10] sm:$0xf]
    %v150 = vld [vmem:[%s144 + $0x14] sm:$0xf]
    %v151 = vld [vmem:[%s144 + $0x18] sm:$0xf]
    %v152 = vld [vmem:[%s144 + $0x1c] sm:$0xf]
    %v153 = vld [vmem:[%s144 + $0x20] sm:$0xf]
    %v154 = vld [vmem:[%s144 + $0x24] sm:$0xf]
    %v155 = vld [vmem:[%s144 + $0x28] sm:$0xf]
    %v156 = vld [vmem:[%s144 + $0x2c] sm:$0xf]
    %v157 = vld [vmem:[%s144 + $0x30] sm:$0xf]
    %v158 = vld [vmem:[%s144 + $0x34] sm:$0xf]
    %v159 = vld [vmem:[%s144 + $0x38] sm:$0xf]
    %v160 = vld [vmem:[%s144 + $0x3c] sm:$0xf]
    %v161 = vunpack.c.l.b16 %v85
    %v162 = vunpack.c.l.b16 %v95
    %v163 = vunpack.c.l.b16 %v109
    %v164 = vunpack.c.l.b16 %v119
    %v165 = vunpack.c.l.b16 %v133
    %v166 = vunpack.c.l.b16 %v143
    %v167 = vpack.c.b16 %v162, %v161
    %v168 = vpack.c.b16 %v164, %v163
    %v169 = vpack.c.b16 %v166, %v165
    %v189 = vunpack.c.l.b16 %v145
    %v190 = vunpack.c.l.b16 %v146
    %v191 = vunpack.c.l.b16 %v147
    %v192 = vunpack.c.l.b16 %v148
    %v193 = vunpack.c.l.b16 %v149
    %v194 = vunpack.c.l.b16 %v150
    %v195 = vunpack.c.l.b16 %v151
    %v196 = vunpack.c.l.b16 %v152
    %v197 = vunpack.c.l.b16 %v153
    %v198 = vunpack.c.l.b16 %v154
    %v199 = vunpack.c.l.b16 %v155
    %v200 = vunpack.c.l.b16 %v156
    %v201 = vunpack.c.l.b16 %v157
    %v202 = vunpack.c.l.b16 %v158
    %v203 = vunpack.c.l.b16 %v159
    %v204 = vunpack.c.l.b16 %v160
    %v205 = vpack.c.b16 %v190, %v189
    %v206 = vpack.c.b16 %v192, %v191
    %v207 = vpack.c.b16 %v194, %v193
    %v208 = vpack.c.b16 %v196, %v195
    %v209 = vpack.c.b16 %v198, %v197
    %v210 = vpack.c.b16 %v200, %v199
    %v211 = vpack.c.b16 %v202, %v201
    %v212 = vpack.c.b16 %v204, %v203
    %221 = vmatprep.subr.bf16.mxu0 0
    %222 = vmatpush1.bf16.msra.mxu0 %v212
    %223 = vmatprep.subr.bf16.mxu0 0
    %224 = vmatpush1.bf16.msra.mxu0 %v211
    %225 = vmatprep.subr.bf16.mxu0 0
    %226 = vmatpush1.bf16.msra.mxu0 %v210
    %227 = vmatprep.subr.bf16.mxu0 0
    %228 = vmatpush1.bf16.msra.mxu0 %v209
    %229 = vmatprep.subr.bf16.mxu0 0
    %230 = vmatpush1.bf16.msra.mxu0 %v208
    %231 = vmatprep.subr.bf16.mxu0 0
    %232 = vmatpush1.bf16.msra.mxu0 %v207
    %233 = vmatprep.subr.bf16.mxu0 0
    %234 = vmatpush1.bf16.msra.mxu0 %v206
    %235 = vmatprep.subr.bf16.mxu0 0
    %236 = vmatpush1.bf16.msra.mxu0 %v205
    %237 = vmatprep.subr.bf16.mxu0 0
    %238 = vmatpush2.bf16.msra.mxu0 0
    %239 = vmatprep.subr.bf16.mxu0 0
    %240 = vmatpush2.bf16.msra.mxu0 0
    %241 = vmatprep.subr.bf16.mxu0 0
    %242 = vmatpush2.bf16.msra.mxu0 0
    %243 = vmatprep.subr.bf16.mxu0 0
    %244 = vmatpush2.bf16.msra.mxu0 0
    %245 = vmatprep.subr.bf16.mxu0 0
    %246 = vmatpush2.bf16.msra.mxu0 0
    %247 = vmatprep.subr.bf16.mxu0 0
    %248 = vmatpush2.bf16.msra.mxu0 0
    %249 = vmatprep.subr.bf16.mxu0 0
    %250 = vmatpush2.bf16.msra.mxu0 0
    %251 = vmatprep.subr.bf16.mxu0 0
    %252 = vmatpush2.bf16.msra.mxu0 0
    %253 = vmatprep.mubr.bf16.mxu0 0
    %254 = vmatmul.mubr.bf16.gmra.mxu0 %v167
    %v255 = vpop.f32.mrf.mxu0
    %v256 = vadd.f32 0.0, %v255
    %v257 = vpop.f32.mrf.mxu0
    %v258 = vpop.f32.mrf.mxu0
    %v259 = vadd.f32 0.0, %v258
    %v260 = vpop.f32.mrf.mxu0
    %261 = vmatprep.mubr.bf16.mxu0 0
    %262 = vmatmul.mubr.bf16.gmra.mxu0 %v168
    %v263 = vpop.f32.mrf.mxu0
    %v264 = vadd.f32 0.0, %v263
    %v265 = vpop.f32.mrf.mxu0
    %v266 = vpop.f32.mrf.mxu0
    %v267 = vadd.f32 0.0, %v266
    %v268 = vpop.f32.mrf.mxu0
    %269 = vmatprep.mubr.bf16.mxu0 0
    %270 = vmatmul.mubr.bf16.gmra.mxu0 %v169
    %v271 = vpop.f32.mrf.mxu0
    %v272 = vadd.f32 0.0, %v271
    %v273 = vpop.f32.mrf.mxu0
    %v274 = vpop.f32.mrf.mxu0
    %v275 = vadd.f32 0.0, %v274
    %v276 = vpop.f32.mrf.mxu0
    %277 = vdwg.mxu0
    %v284 = vunpack.c.l.b16 %v44
    %v285 = vunpack.c.l.b16 %v45
    %v286 = vunpack.c.l.b16 %v46
    %v287 = vunpack.c.l.b16 %v47
    %v288 = vunpack.c.l.b16 %v48
    %v289 = vunpack.c.l.b16 %v49
    %v290 = vpack.c.b16 %v285, %v284
    %v291 = vpack.c.b16 %v287, %v286
    %v292 = vpack.c.b16 %v289, %v288
    %v312 = vunpack.c.l.b16 %v50
    %v313 = vunpack.c.l.b16 %v51
    %v314 = vunpack.c.l.b16 %v52
    %v315 = vunpack.c.l.b16 %v53
    %v316 = vunpack.c.l.b16 %v54
    %v317 = vunpack.c.l.b16 %v55
    %v318 = vunpack.c.l.b16 %v56
    %v319 = vunpack.c.l.b16 %v57
    %v320 = vunpack.c.l.b16 %v58
    %v321 = vunpack.c.l.b16 %v59
    %v322 = vunpack.c.l.b16 %v60
    %v323 = vunpack.c.l.b16 %v61
    %v324 = vunpack.c.l.b16 %v62
    %v325 = vunpack.c.l.b16 %v63
    %v326 = vunpack.c.l.b16 %v64
    %v327 = vunpack.c.l.b16 %v65
    %v328 = vpack.c.b16 %v313, %v312
    %v329 = vpack.c.b16 %v315, %v314
    %v330 = vpack.c.b16 %v317, %v316
    %v331 = vpack.c.b16 %v319, %v318
    %v332 = vpack.c.b16 %v321, %v320
    %v333 = vpack.c.b16 %v323, %v322
    %v334 = vpack.c.b16 %v325, %v324
    %v335 = vpack.c.b16 %v327, %v326
    %344 = vmatprep.subr.bf16.mxu0 0
    %345 = vmatpush1.bf16.msra.mxu0 %v335
    %346 = vmatprep.subr.bf16.mxu0 0
    %347 = vmatpush1.bf16.msra.mxu0 %v334
    %348 = vmatprep.subr.bf16.mxu0 0
    %349 = vmatpush1.bf16.msra.mxu0 %v333
    %350 = vmatprep.subr.bf16.mxu0 0
    %351 = vmatpush1.bf16.msra.mxu0 %v332
    %352 = vmatprep.subr.bf16.mxu0 0
    %353 = vmatpush1.bf16.msra.mxu0 %v331
    %354 = vmatprep.subr.bf16.mxu0 0
    %355 = vmatpush1.bf16.msra.mxu0 %v330
    %356 = vmatprep.subr.bf16.mxu0 0
    %357 = vmatpush1.bf16.msra.mxu0 %v329
    %358 = vmatprep.subr.bf16.mxu0 0
    %359 = vmatpush1.bf16.msra.mxu0 %v328
    %360 = vmatprep.subr.bf16.mxu0 0
    %361 = vmatpush2.bf16.msra.mxu0 0
    %362 = vmatprep.subr.bf16.mxu0 0
    %363 = vmatpush2.bf16.msra.mxu0 0
    %364 = vmatprep.subr.bf16.mxu0 0
    %365 = vmatpush2.bf16.msra.mxu0 0
    %366 = vmatprep.subr.bf16.mxu0 0
    %367 = vmatpush2.bf16.msra.mxu0 0
    %368 = vmatprep.subr.bf16.mxu0 0
    %369 = vmatpush2.bf16.msra.mxu0 0
    %370 = vmatprep.subr.bf16.mxu0 0
    %371 = vmatpush2.bf16.msra.mxu0 0
    %372 = vmatprep.subr.bf16.mxu0 0
    %373 = vmatpush2.bf16.msra.mxu0 0
    %374 = vmatprep.subr.bf16.mxu0 0
    %375 = vmatpush2.bf16.msra.mxu0 0
    %376 = vmatprep.mubr.bf16.mxu0 0
    %377 = vmatmul.mubr.bf16.gmra.mxu0 %v290
    %v378 = vpop.f32.mrf.mxu0
    %v379 = vadd.f32 %v256, %v378
    %v380 = vpop.f32.mrf.mxu0
    %v381 = vpop.f32.mrf.mxu0
    %v382 = vadd.f32 %v259, %v381
    %v383 = vpop.f32.mrf.mxu0
    %384 = vmatprep.mubr.bf16.mxu0 0
    %385 = vmatmul.mubr.bf16.gmra.mxu0 %v291
    %v386 = vpop.f32.mrf.mxu0
    %v387 = vadd.f32 %v264, %v386
    %v388 = vpop.f32.mrf.mxu0
    %v389 = vpop.f32.mrf.mxu0
    %v390 = vadd.f32 %v267, %v389
    %v391 = vpop.f32.mrf.mxu0
    %392 = vmatprep.mubr.bf16.mxu0 0
    %393 = vmatmul.mubr.bf16.gmra.mxu0 %v292
    %v394 = vpop.f32.mrf.mxu0
    %v395 = vadd.f32 %v272, %v394
    %v396 = vpop.f32.mrf.mxu0
    %v397 = vpop.f32.mrf.mxu0
    %v398 = vadd.f32 %v275, %v397
    %v399 = vpop.f32.mrf.mxu0
    %400 = vdwg.mxu0
    %v401 = vld [vmem:[#allocation2] sm:$0xe]
    %v402 = vld [vmem:[#allocation2 + $0xc] sm:$0xe]
    %v403 = vld [vmem:[#allocation2 + $0x18] sm:$0xe]
    %vm410 = vcmask 1042432
    %vm411 = vcmask 1046532
    %vm412 = vmor %vm410, %vm411
    %v413 = vrot.slane %v401, 5
    %v414 = vrot.slane %v413, 4
    %v415 = vrot.slane %v45, 5
    %v416 = vsel %vm412, %v414, %v415
    %v417 = vrot.slane %v415, 4
    %v418 = vrot.slane %v66, 5
    %v419 = vsel %vm412, %v417, %v418
    %v420 = vrot.slane %v402, 5
    %v421 = vrot.slane %v420, 4
    %v422 = vrot.slane %v47, 5
    %v423 = vsel %vm412, %v421, %v422
    %v424 = vrot.slane %v422, 4
    %v425 = vrot.slane %v67, 5
    %v426 = vsel %vm412, %v424, %v425
    %v427 = vrot.slane %v403, 5
    %v428 = vrot.slane %v427, 4
    %v429 = vrot.slane %v49, 5
    %v430 = vsel %vm412, %v428, %v429
    %v431 = vrot.slane %v429, 4
    %v432 = vrot.slane %v68, 5
    %v433 = vsel %vm412, %v431, %v432
    %s434 = scalar_lea.vmem [#allocation5], 128
    %v435 = vld [vmem:[%s434] sm:$0xf]
    %v436 = vld [vmem:[%s434 + $0x4] sm:$0xf]
    %v437 = vld [vmem:[%s434 + $0x8] sm:$0xf]
    %v438 = vld [vmem:[%s434 + $0xc] sm:$0xf]
    %v439 = vld [vmem:[%s434 + $0x10] sm:$0xf]
    %v440 = vld [vmem:[%s434 + $0x14] sm:$0xf]
    %v441 = vld [vmem:[%s434 + $0x18] sm:$0xf]
    %v442 = vld [vmem:[%s434 + $0x1c] sm:$0xf]
    %v443 = vld [vmem:[%s434 + $0x20] sm:$0xf]
    %v444 = vld [vmem:[%s434 + $0x24] sm:$0xf]
    %v445 = vld [vmem:[%s434 + $0x28] sm:$0xf]
    %v446 = vld [vmem:[%s434 + $0x2c] sm:$0xf]
    %v447 = vld [vmem:[%s434 + $0x30] sm:$0xf]
    %v448 = vld [vmem:[%s434 + $0x34] sm:$0xf]
    %v449 = vld [vmem:[%s434 + $0x38] sm:$0xf]
    %v450 = vld [vmem:[%s434 + $0x3c] sm:$0xf]
    %v451 = vunpack.c.l.b16 %v416
    %v452 = vunpack.c.l.b16 %v419
    %v453 = vunpack.c.l.b16 %v423
    %v454 = vunpack.c.l.b16 %v426
    %v455 = vunpack.c.l.b16 %v430
    %v456 = vunpack.c.l.b16 %v433
    %v457 = vpack.c.b16 %v452, %v451
    %v458 = vpack.c.b16 %v454, %v453
    %v459 = vpack.c.b16 %v456, %v455
    %v479 = vunpack.c.l.b16 %v435
    %v480 = vunpack.c.l.b16 %v436
    %v481 = vunpack.c.l.b16 %v437
    %v482 = vunpack.c.l.b16 %v438
    %v483 = vunpack.c.l.b16 %v439
    %v484 = vunpack.c.l.b16 %v440
    %v485 = vunpack.c.l.b16 %v441
    %v486 = vunpack.c.l.b16 %v442
    %v487 = vunpack.c.l.b16 %v443
    %v488 = vunpack.c.l.b16 %v444
    %v489 = vunpack.c.l.b16 %v445
    %v490 = vunpack.c.l.b16 %v446
    %v491 = vunpack.c.l.b16 %v447
    %v492 = vunpack.c.l.b16 %v448
    %v493 = vunpack.c.l.b16 %v449
    %v494 = vunpack.c.l.b16 %v450
    %v495 = vpack.c.b16 %v480, %v479
    %v496 = vpack.c.b16 %v482, %v481
    %v497 = vpack.c.b16 %v484, %v483
    %v498 = vpack.c.b16 %v486, %v485
    %v499 = vpack.c.b16 %v488, %v487
    %v500 = vpack.c.b16 %v490, %v489
    %v501 = vpack.c.b16 %v492, %v491
    %v502 = vpack.c.b16 %v494, %v493
    %511 = vmatprep.subr.bf16.mxu0 0
    %512 = vmatpush1.bf16.msra.mxu0 %v502
    %513 = vmatprep.subr.bf16.mxu0 0
    %514 = vmatpush1.bf16.msra.mxu0 %v501
    %515 = vmatprep.subr.bf16.mxu0 0
    %516 = vmatpush1.bf16.msra.mxu0 %v500
    %517 = vmatprep.subr.bf16.mxu0 0
    %518 = vmatpush1.bf16.msra.mxu0 %v499
    %519 = vmatprep.subr.bf16.mxu0 0
    %520 = vmatpush1.bf16.msra.mxu0 %v498
    %521 = vmatprep.subr.bf16.mxu0 0
    %522 = vmatpush1.bf16.msra.mxu0 %v497
    %523 = vmatprep.subr.bf16.mxu0 0
    %524 = vmatpush1.bf16.msra.mxu0 %v496
    %525 = vmatprep.subr.bf16.mxu0 0
    %526 = vmatpush1.bf16.msra.mxu0 %v495
    %527 = vmatprep.subr.bf16.mxu0 0
    %528 = vmatpush2.bf16.msra.mxu0 0
    %529 = vmatprep.subr.bf16.mxu0 0
    %530 = vmatpush2.bf16.msra.mxu0 0
    %531 = vmatprep.subr.bf16.mxu0 0
    %532 = vmatpush2.bf16.msra.mxu0 0
    %533 = vmatprep.subr.bf16.mxu0 0
    %534 = vmatpush2.bf16.msra.mxu0 0
    %535 = vmatprep.subr.bf16.mxu0 0
    %536 = vmatpush2.bf16.msra.mxu0 0
    %537 = vmatprep.subr.bf16.mxu0 0
    %538 = vmatpush2.bf16.msra.mxu0 0
    %539 = vmatprep.subr.bf16.mxu0 0
    %540 = vmatpush2.bf16.msra.mxu0 0
    %541 = vmatprep.subr.bf16.mxu0 0
    %542 = vmatpush2.bf16.msra.mxu0 0
    %543 = vmatprep.mubr.bf16.mxu0 0
    %544 = vmatmul.mubr.bf16.gmra.mxu0 %v457
    %v545 = vpop.f32.mrf.mxu0
    %v546 = vadd.f32 0.0, %v545
    %v547 = vpop.f32.mrf.mxu0
    %v548 = vpop.f32.mrf.mxu0
    %v549 = vadd.f32 0.0, %v548
    %v550 = vpop.f32.mrf.mxu0
    %551 = vmatprep.mubr.bf16.mxu0 0
    %552 = vmatmul.mubr.bf16.gmra.mxu0 %v458
    %v553 = vpop.f32.mrf.mxu0
    %v554 = vadd.f32 0.0, %v553
    %v555 = vpop.f32.mrf.mxu0
    %v556 = vpop.f32.mrf.mxu0
    %v557 = vadd.f32 0.0, %v556
    %v558 = vpop.f32.mrf.mxu0
    %559 = vmatprep.mubr.bf16.mxu0 0
    %560 = vmatmul.mubr.bf16.gmra.mxu0 %v459
    %v561 = vpop.f32.mrf.mxu0
    %v562 = vadd.f32 0.0, %v561
    %v563 = vpop.f32.mrf.mxu0
    %v564 = vpop.f32.mrf.mxu0
    %v565 = vadd.f32 0.0, %v564
    %v566 = vpop.f32.mrf.mxu0
    %567 = vdwg.mxu0
    %v568 = vadd.f32 %v379, %v546
    %v569 = vadd.f32 %v382, %v549
    %v570 = vadd.f32 %v387, %v554
    %v571 = vadd.f32 %v390, %v557
    %v572 = vadd.f32 %v395, %v562
    %v573 = vadd.f32 %v398, %v565
    %s574 = scalar_lea.vmem [#allocation2], 12
    %v575 = vld [vmem:[%s574] sm:$0xf]
    %v576 = vld [vmem:[%s574 + $0x4] sm:$0xf]
    %v577 = vld [vmem:[%s574 + $0xc] sm:$0xf]
    %v578 = vld [vmem:[%s574 + $0x10] sm:$0xf]
    %v579 = vld [vmem:[%s574 + $0x18] sm:$0xf]
    %v580 = vld [vmem:[%s574 + $0x1c] sm:$0xf]
    %s581 = scalar_lea.vmem [#allocation5], 192
    %v582 = vld [vmem:[%s581] sm:$0xf]
    %v583 = vld [vmem:[%s581 + $0x4] sm:$0xf]
    %v584 = vld [vmem:[%s581 + $0x8] sm:$0xf]
    %v585 = vld [vmem:[%s581 + $0xc] sm:$0xf]
    %v586 = vld [vmem:[%s581 + $0x10] sm:$0xf]
    %v587 = vld [vmem:[%s581 + $0x14] sm:$0xf]
    %v588 = vld [vmem:[%s581 + $0x18] sm:$0xf]
    %v589 = vld [vmem:[%s581 + $0x1c] sm:$0xf]
    %v590 = vld [vmem:[%s581 + $0x20] sm:$0xf]
    %v591 = vld [vmem:[%s581 + $0x24] sm:$0xf]
    %v592 = vld [vmem:[%s581 + $0x28] sm:$0xf]
    %v593 = vld [vmem:[%s581 + $0x2c] sm:$0xf]
    %v594 = vld [vmem:[%s581 + $0x30] sm:$0xf]
    %v595 = vld [vmem:[%s581 + $0x34] sm:$0xf]
    %v596 = vld [vmem:[%s581 + $0x38] sm:$0xf]
    %v597 = vld [vmem:[%s581 + $0x3c] sm:$0xf]
    %v604 = vunpack.c.l.b16 %v575
    %v605 = vunpack.c.l.b16 %v576
    %v606 = vunpack.c.l.b16 %v577
    %v607 = vunpack.c.l.b16 %v578
    %v608 = vunpack.c.l.b16 %v579
    %v609 = vunpack.c.l.b16 %v580
    %v610 = vpack.c.b16 %v605, %v604
    %v611 = vpack.c.b16 %v607, %v606
    %v612 = vpack.c.b16 %v609, %v608
    %v632 = vunpack.c.l.b16 %v582
    %v633 = vunpack.c.l.b16 %v583
    %v634 = vunpack.c.l.b16 %v584
    %v635 = vunpack.c.l.b16 %v585
    %v636 = vunpack.c.l.b16 %v586
    %v637 = vunpack.c.l.b16 %v587
    %v638 = vunpack.c.l.b16 %v588
    %v639 = vunpack.c.l.b16 %v589
    %v640 = vunpack.c.l.b16 %v590
    %v641 = vunpack.c.l.b16 %v591
    %v642 = vunpack.c.l.b16 %v592
    %v643 = vunpack.c.l.b16 %v593
    %v644 = vunpack.c.l.b16 %v594
    %v645 = vunpack.c.l.b16 %v595
    %v646 = vunpack.c.l.b16 %v596
    %v647 = vunpack.c.l.b16 %v597
    %v648 = vpack.c.b16 %v633, %v632
    %v649 = vpack.c.b16 %v635, %v634
    %v650 = vpack.c.b16 %v637, %v636
    %v651 = vpack.c.b16 %v639, %v638
    %v652 = vpack.c.b16 %v641, %v640
    %v653 = vpack.c.b16 %v643, %v642
    %v654 = vpack.c.b16 %v645, %v644
    %v655 = vpack.c.b16 %v647, %v646
    %664 = vmatprep.subr.bf16.mxu0 0
    %665 = vmatpush1.bf16.msra.mxu0 %v655
    %666 = vmatprep.subr.bf16.mxu0 0
    %667 = vmatpush1.bf16.msra.mxu0 %v654
    %668 = vmatprep.subr.bf16.mxu0 0
    %669 = vmatpush1.bf16.msra.mxu0 %v653
    %670 = vmatprep.subr.bf16.mxu0 0
    %671 = vmatpush1.bf16.msra.mxu0 %v652
    %672 = vmatprep.subr.bf16.mxu0 0
    %673 = vmatpush1.bf16.msra.mxu0 %v651
    %674 = vmatprep.subr.bf16.mxu0 0
    %675 = vmatpush1.bf16.msra.mxu0 %v650
    %676 = vmatprep.subr.bf16.mxu0 0
    %677 = vmatpush1.bf16.msra.mxu0 %v649
    %678 = vmatprep.subr.bf16.mxu0 0
    %679 = vmatpush1.bf16.msra.mxu0 %v648
    %680 = vmatprep.subr.bf16.mxu0 0
    %681 = vmatpush2.bf16.msra.mxu0 0
    %682 = vmatprep.subr.bf16.mxu0 0
    %683 = vmatpush2.bf16.msra.mxu0 0
    %684 = vmatprep.subr.bf16.mxu0 0
    %685 = vmatpush2.bf16.msra.mxu0 0
    %686 = vmatprep.subr.bf16.mxu0 0
    %687 = vmatpush2.bf16.msra.mxu0 0
    %688 = vmatprep.subr.bf16.mxu0 0
    %689 = vmatpush2.bf16.msra.mxu0 0
    %690 = vmatprep.subr.bf16.mxu0 0
    %691 = vmatpush2.bf16.msra.mxu0 0
    %692 = vmatprep.subr.bf16.mxu0 0
    %693 = vmatpush2.bf16.msra.mxu0 0
    %694 = vmatprep.subr.bf16.mxu0 0
    %695 = vmatpush2.bf16.msra.mxu0 0
    %696 = vmatprep.mubr.bf16.mxu0 0
    %697 = vmatmul.mubr.bf16.gmra.mxu0 %v610
    %v698 = vpop.f32.mrf.mxu0
    %v699 = vadd.f32 0.0, %v698
    %v700 = vpop.f32.mrf.mxu0
    %v701 = vpop.f32.mrf.mxu0
    %v702 = vadd.f32 0.0, %v701
    %v703 = vpop.f32.mrf.mxu0
    %704 = vmatprep.mubr.bf16.mxu0 0
    %705 = vmatmul.mubr.bf16.gmra.mxu0 %v611
    %v706 = vpop.f32.mrf.mxu0
    %v707 = vadd.f32 0.0, %v706
    %v708 = vpop.f32.mrf.mxu0
    %v709 = vpop.f32.mrf.mxu0
    %v710 = vadd.f32 0.0, %v709
    %v711 = vpop.f32.mrf.mxu0
    %712 = vmatprep.mubr.bf16.mxu0 0
    %713 = vmatmul.mubr.bf16.gmra.mxu0 %v612
    %v714 = vpop.f32.mrf.mxu0
    %v715 = vadd.f32 0.0, %v714
    %v716 = vpop.f32.mrf.mxu0
    %v717 = vpop.f32.mrf.mxu0
    %v718 = vadd.f32 0.0, %v717
    %v719 = vpop.f32.mrf.mxu0
    %720 = vdwg.mxu0
    %v721 = vadd.f32 %v568, %v699
    %v722 = vadd.f32 %v569, %v702
    %v723 = vadd.f32 %v570, %v707
    %v724 = vadd.f32 %v571, %v710
    %v725 = vadd.f32 %v572, %v715
    %v726 = vadd.f32 %v573, %v718
    %v727 = vld [vmem:[%s574] sm:$0xf]
    %v728 = vld [vmem:[%s574 + $0x4] sm:$0xf]
    %v729 = vld [vmem:[%s574 + $0x8] sm:$0x1]
    %v730 = vld [vmem:[%s574 + $0xc] sm:$0xf]
    %v731 = vld [vmem:[%s574 + $0x10] sm:$0xf]
    %v732 = vld [vmem:[%s574 + $0x14] sm:$0x1]
    %v733 = vld [vmem:[%s574 + $0x18] sm:$0xf]
    %v734 = vld [vmem:[%s574 + $0x1c] sm:$0xf]
    %v735 = vld [vmem:[%s574 + $0x20] sm:$0x1]
    %v737 = vshrl.u32 %v727, 16
    %v739 = vrot.slane %v737, 4
    %v740 = vshll.u32 %v727, 16
    %v742 = vrot.slane %v740, 5
    %v743 = vor.u32 %v739, %v742
    %v744 = vrot.slane %v743, 4
    %v746 = vshll.u32 %v728, 16
    %v748 = vrot.slane %v746, 5
    %v749 = vsel %vm71, %v744, %v748
    %v750 = vshrl.u32 %v728, 16
    %v752 = vrot.slane %v750, 4
    %v753 = vor.u32 %v752, %v748
    %v754 = vrot.slane %v753, 4
    %v756 = vshll.u32 %v729, 16
    %v758 = vrot.slane %v756, 5
    %v759 = vsel %vm71, %v754, %v758
    %v761 = vshrl.u32 %v730, 16
    %v763 = vrot.slane %v761, 4
    %v764 = vshll.u32 %v730, 16
    %v766 = vrot.slane %v764, 5
    %v767 = vor.u32 %v763, %v766
    %v768 = vrot.slane %v767, 4
    %v770 = vshll.u32 %v731, 16
    %v772 = vrot.slane %v770, 5
    %v773 = vsel %vm71, %v768, %v772
    %v774 = vshrl.u32 %v731, 16
    %v776 = vrot.slane %v774, 4
    %v777 = vor.u32 %v776, %v772
    %v778 = vrot.slane %v777, 4
    %v780 = vshll.u32 %v732, 16
    %v782 = vrot.slane %v780, 5
    %v783 = vsel %vm71, %v778, %v782
    %v785 = vshrl.u32 %v733, 16
    %v787 = vrot.slane %v785, 4
    %v788 = vshll.u32 %v733, 16
    %v790 = vrot.slane %v788, 5
    %v791 = vor.u32 %v787, %v790
    %v792 = vrot.slane %v791, 4
    %v794 = vshll.u32 %v734, 16
    %v796 = vrot.slane %v794, 5
    %v797 = vsel %vm71, %v792, %v796
    %v798 = vshrl.u32 %v734, 16
    %v800 = vrot.slane %v798, 4
    %v801 = vor.u32 %v800, %v796
    %v802 = vrot.slane %v801, 4
    %v804 = vshll.u32 %v735, 16
    %v806 = vrot.slane %v804, 5
    %v807 = vsel %vm71, %v802, %v806
    %s808 = scalar_lea.vmem [#allocation5], 256
    %v809 = vld [vmem:[%s808] sm:$0xf]
    %v810 = vld [vmem:[%s808 + $0x4] sm:$0xf]
    %v811 = vld [vmem:[%s808 + $0x8] sm:$0xf]
    %v812 = vld [vmem:[%s808 + $0xc] sm:$0xf]
    %v813 = vld [vmem:[%s808 + $0x10] sm:$0xf]
    %v814 = vld [vmem:[%s808 + $0x14] sm:$0xf]
    %v815 = vld [vmem:[%s808 + $0x18] sm:$0xf]
    %v816 = vld [vmem:[%s808 + $0x1c] sm:$0xf]
    %v817 = vld [vmem:[%s808 + $0x20] sm:$0xf]
    %v818 = vld [vmem:[%s808 + $0x24] sm:$0xf]
    %v819 = vld [vmem:[%s808 + $0x28] sm:$0xf]
    %v820 = vld [vmem:[%s808 + $0x2c] sm:$0xf]
    %v821 = vld [vmem:[%s808 + $0x30] sm:$0xf]
    %v822 = vld [vmem:[%s808 + $0x34] sm:$0xf]
    %v823 = vld [vmem:[%s808 + $0x38] sm:$0xf]
    %v824 = vld [vmem:[%s808 + $0x3c] sm:$0xf]
    %v825 = vunpack.c.l.b16 %v749
    %v826 = vunpack.c.l.b16 %v759
    %v827 = vunpack.c.l.b16 %v773
    %v828 = vunpack.c.l.b16 %v783
    %v829 = vunpack.c.l.b16 %v797
    %v830 = vunpack.c.l.b16 %v807
    %v831 = vpack.c.b16 %v826, %v825
    %v832 = vpack.c.b16 %v828, %v827
    %v833 = vpack.c.b16 %v830, %v829
    %v853 = vunpack.c.l.b16 %v809
    %v854 = vunpack.c.l.b16 %v810
    %v855 = vunpack.c.l.b16 %v811
    %v856 = vunpack.c.l.b16 %v812
    %v857 = vunpack.c.l.b16 %v813
    %v858 = vunpack.c.l.b16 %v814
    %v859 = vunpack.c.l.b16 %v815
    %v860 = vunpack.c.l.b16 %v816
    %v861 = vunpack.c.l.b16 %v817
    %v862 = vunpack.c.l.b16 %v818
    %v863 = vunpack.c.l.b16 %v819
    %v864 = vunpack.c.l.b16 %v820
    %v865 = vunpack.c.l.b16 %v821
    %v866 = vunpack.c.l.b16 %v822
    %v867 = vunpack.c.l.b16 %v823
    %v868 = vunpack.c.l.b16 %v824
    %v869 = vpack.c.b16 %v854, %v853
    %v870 = vpack.c.b16 %v856, %v855
    %v871 = vpack.c.b16 %v858, %v857
    %v872 = vpack.c.b16 %v860, %v859
    %v873 = vpack.c.b16 %v862, %v861
    %v874 = vpack.c.b16 %v864, %v863
    %v875 = vpack.c.b16 %v866, %v865
    %v876 = vpack.c.b16 %v868, %v867
    %885 = vmatprep.subr.bf16.mxu0 0
    %886 = vmatpush1.bf16.msra.mxu0 %v876
    %887 = vmatprep.subr.bf16.mxu0 0
    %888 = vmatpush1.bf16.msra.mxu0 %v875
    %889 = vmatprep.subr.bf16.mxu0 0
    %890 = vmatpush1.bf16.msra.mxu0 %v874
    %891 = vmatprep.subr.bf16.mxu0 0
    %892 = vmatpush1.bf16.msra.mxu0 %v873
    %893 = vmatprep.subr.bf16.mxu0 0
    %894 = vmatpush1.bf16.msra.mxu0 %v872
    %895 = vmatprep.subr.bf16.mxu0 0
    %896 = vmatpush1.bf16.msra.mxu0 %v871
    %897 = vmatprep.subr.bf16.mxu0 0
    %898 = vmatpush1.bf16.msra.mxu0 %v870
    %899 = vmatprep.subr.bf16.mxu0 0
    %900 = vmatpush1.bf16.msra.mxu0 %v869
    %901 = vmatprep.subr.bf16.mxu0 0
    %902 = vmatpush2.bf16.msra.mxu0 0
    %903 = vmatprep.subr.bf16.mxu0 0
    %904 = vmatpush2.bf16.msra.mxu0 0
    %905 = vmatprep.subr.bf16.mxu0 0
    %906 = vmatpush2.bf16.msra.mxu0 0
    %907 = vmatprep.subr.bf16.mxu0 0
    %908 = vmatpush2.bf16.msra.mxu0 0
    %909 = vmatprep.subr.bf16.mxu0 0
    %910 = vmatpush2.bf16.msra.mxu0 0
    %911 = vmatprep.subr.bf16.mxu0 0
    %912 = vmatpush2.bf16.msra.mxu0 0
    %913 = vmatprep.subr.bf16.mxu0 0
    %914 = vmatpush2.bf16.msra.mxu0 0
    %915 = vmatprep.subr.bf16.mxu0 0
    %916 = vmatpush2.bf16.msra.mxu0 0
    %917 = vmatprep.mubr.bf16.mxu0 0
    %918 = vmatmul.mubr.bf16.gmra.mxu0 %v831
    %v919 = vpop.f32.mrf.mxu0
    %v920 = vadd.f32 0.0, %v919
    %v921 = vpop.f32.mrf.mxu0
    %v922 = vpop.f32.mrf.mxu0
    %v923 = vadd.f32 0.0, %v922
    %v924 = vpop.f32.mrf.mxu0
    %925 = vmatprep.mubr.bf16.mxu0 0
    %926 = vmatmul.mubr.bf16.gmra.mxu0 %v832
    %v927 = vpop.f32.mrf.mxu0
    %v928 = vadd.f32 0.0, %v927
    %v929 = vpop.f32.mrf.mxu0
    %v930 = vpop.f32.mrf.mxu0
    %v931 = vadd.f32 0.0, %v930
    %v932 = vpop.f32.mrf.mxu0
    %933 = vmatprep.mubr.bf16.mxu0 0
    %934 = vmatmul.mubr.bf16.gmra.mxu0 %v833
    %v935 = vpop.f32.mrf.mxu0
    %v936 = vadd.f32 0.0, %v935
    %v937 = vpop.f32.mrf.mxu0
    %v938 = vpop.f32.mrf.mxu0
    %v939 = vadd.f32 0.0, %v938
    %v940 = vpop.f32.mrf.mxu0
    %941 = vdwg.mxu0
    %v942 = vadd.f32 %v721, %v920
    %v943 = vadd.f32 %v722, %v923
    %v944 = vadd.f32 %v723, %v928
    %v945 = vadd.f32 %v724, %v931
    %v946 = vadd.f32 %v725, %v936
    %v947 = vadd.f32 %v726, %v939
    %v948 = vld [vmem:[%s574] sm:$0xe]
    %v949 = vld [vmem:[%s574 + $0xc] sm:$0xe]
    %v950 = vld [vmem:[%s574 + $0x18] sm:$0xe]
    %v960 = vrot.slane %v948, 5
    %v961 = vrot.slane %v960, 4
    %v962 = vrot.slane %v728, 5
    %v963 = vsel %vm412, %v961, %v962
    %v964 = vrot.slane %v962, 4
    %v965 = vrot.slane %v729, 5
    %v966 = vsel %vm412, %v964, %v965
    %v967 = vrot.slane %v949, 5
    %v968 = vrot.slane %v967, 4
    %v969 = vrot.slane %v731, 5
    %v970 = vsel %vm412, %v968, %v969
    %v971 = vrot.slane %v969, 4
    %v972 = vrot.slane %v732, 5
    %v973 = vsel %vm412, %v971, %v972
    %v974 = vrot.slane %v950, 5
    %v975 = vrot.slane %v974, 4
    %v976 = vrot.slane %v734, 5
    %v977 = vsel %vm412, %v975, %v976
    %v978 = vrot.slane %v976, 4
    %v979 = vrot.slane %v735, 5
    %v980 = vsel %vm412, %v978, %v979
    %s981 = scalar_lea.vmem [#allocation5], 320
    %v982 = vld [vmem:[%s981] sm:$0xf]
    %v983 = vld [vmem:[%s981 + $0x4] sm:$0xf]
    %v984 = vld [vmem:[%s981 + $0x8] sm:$0xf]
    %v985 = vld [vmem:[%s981 + $0xc] sm:$0xf]
    %v986 = vld [vmem:[%s981 + $0x10] sm:$0xf]
    %v987 = vld [vmem:[%s981 + $0x14] sm:$0xf]
    %v988 = vld [vmem:[%s981 + $0x18] sm:$0xf]
    %v989 = vld [vmem:[%s981 + $0x1c] sm:$0xf]
    %v990 = vld [vmem:[%s981 + $0x20] sm:$0xf]
    %v991 = vld [vmem:[%s981 + $0x24] sm:$0xf]
    %v992 = vld [vmem:[%s981 + $0x28] sm:$0xf]
    %v993 = vld [vmem:[%s981 + $0x2c] sm:$0xf]
    %v994 = vld [vmem:[%s981 + $0x30] sm:$0xf]
    %v995 = vld [vmem:[%s981 + $0x34] sm:$0xf]
    %v996 = vld [vmem:[%s981 + $0x38] sm:$0xf]
    %v997 = vld [vmem:[%s981 + $0x3c] sm:$0xf]
    %v998 = vunpack.c.l.b16 %v963
    %v999 = vunpack.c.l.b16 %v966
    %v1000 = vunpack.c.l.b16 %v970
    %v1001 = vunpack.c.l.b16 %v973
    %v1002 = vunpack.c.l.b16 %v977
    %v1003 = vunpack.c.l.b16 %v980
    %v1004 = vpack.c.b16 %v999, %v998
    %v1005 = vpack.c.b16 %v1001, %v1000
    %v1006 = vpack.c.b16 %v1003, %v1002
    %v1026 = vunpack.c.l.b16 %v982
    %v1027 = vunpack.c.l.b16 %v983
    %v1028 = vunpack.c.l.b16 %v984
    %v1029 = vunpack.c.l.b16 %v985
    %v1030 = vunpack.c.l.b16 %v986
    %v1031 = vunpack.c.l.b16 %v987
    %v1032 = vunpack.c.l.b16 %v988
    %v1033 = vunpack.c.l.b16 %v989
    %v1034 = vunpack.c.l.b16 %v990
    %v1035 = vunpack.c.l.b16 %v991
    %v1036 = vunpack.c.l.b16 %v992
    %v1037 = vunpack.c.l.b16 %v993
    %v1038 = vunpack.c.l.b16 %v994
    %v1039 = vunpack.c.l.b16 %v995
    %v1040 = vunpack.c.l.b16 %v996
    %v1041 = vunpack.c.l.b16 %v997
    %v1042 = vpack.c.b16 %v1027, %v1026
    %v1043 = vpack.c.b16 %v1029, %v1028
    %v1044 = vpack.c.b16 %v1031, %v1030
    %v1045 = vpack.c.b16 %v1033, %v1032
    %v1046 = vpack.c.b16 %v1035, %v1034
    %v1047 = vpack.c.b16 %v1037, %v1036
    %v1048 = vpack.c.b16 %v1039, %v1038
    %v1049 = vpack.c.b16 %v1041, %v1040
    %1058 = vmatprep.subr.bf16.mxu0 0
    %1059 = vmatpush1.bf16.msra.mxu0 %v1049
    %1060 = vmatprep.subr.bf16.mxu0 0
    %1061 = vmatpush1.bf16.msra.mxu0 %v1048
    %1062 = vmatprep.subr.bf16.mxu0 0
    %1063 = vmatpush1.bf16.msra.mxu0 %v1047
    %1064 = vmatprep.subr.bf16.mxu0 0
    %1065 = vmatpush1.bf16.msra.mxu0 %v1046
    %1066 = vmatprep.subr.bf16.mxu0 0
    %1067 = vmatpush1.bf16.msra.mxu0 %v1045
    %1068 = vmatprep.subr.bf16.mxu0 0
    %1069 = vmatpush1.bf16.msra.mxu0 %v1044
    %1070 = vmatprep.subr.bf16.mxu0 0
    %1071 = vmatpush1.bf16.msra.mxu0 %v1043
    %1072 = vmatprep.subr.bf16.mxu0 0
    %1073 = vmatpush1.bf16.msra.mxu0 %v1042
    %1074 = vmatprep.subr.bf16.mxu0 0
    %1075 = vmatpush2.bf16.msra.mxu0 0
    %1076 = vmatprep.subr.bf16.mxu0 0
    %1077 = vmatpush2.bf16.msra.mxu0 0
    %1078 = vmatprep.subr.bf16.mxu0 0
    %1079 = vmatpush2.bf16.msra.mxu0 0
    %1080 = vmatprep.subr.bf16.mxu0 0
    %1081 = vmatpush2.bf16.msra.mxu0 0
    %1082 = vmatprep.subr.bf16.mxu0 0
    %1083 = vmatpush2.bf16.msra.mxu0 0
    %1084 = vmatprep.subr.bf16.mxu0 0
    %1085 = vmatpush2.bf16.msra.mxu0 0
    %1086 = vmatprep.subr.bf16.mxu0 0
    %1087 = vmatpush2.bf16.msra.mxu0 0
    %1088 = vmatprep.subr.bf16.mxu0 0
    %1089 = vmatpush2.bf16.msra.mxu0 0
    %1090 = vmatprep.mubr.bf16.mxu0 0
    %1091 = vmatmul.mubr.bf16.gmra.mxu0 %v1004
    %v1092 = vpop.f32.mrf.mxu0
    %v1093 = vadd.f32 0.0, %v1092
    %v1094 = vpop.f32.mrf.mxu0
    %v1095 = vpop.f32.mrf.mxu0
    %v1096 = vadd.f32 0.0, %v1095
    %v1097 = vpop.f32.mrf.mxu0
    %1098 = vmatprep.mubr.bf16.mxu0 0
    %1099 = vmatmul.mubr.bf16.gmra.mxu0 %v1005
    %v1100 = vpop.f32.mrf.mxu0
    %v1101 = vadd.f32 0.0, %v1100
    %v1102 = vpop.f32.mrf.mxu0
    %v1103 = vpop.f32.mrf.mxu0
    %v1104 = vadd.f32 0.0, %v1103
    %v1105 = vpop.f32.mrf.mxu0
    %1106 = vmatprep.mubr.bf16.mxu0 0
    %1107 = vmatmul.mubr.bf16.gmra.mxu0 %v1006
    %v1108 = vpop.f32.mrf.mxu0
    %v1109 = vadd.f32 0.0, %v1108
    %v1110 = vpop.f32.mrf.mxu0
    %v1111 = vpop.f32.mrf.mxu0
    %v1112 = vadd.f32 0.0, %v1111
    %v1113 = vpop.f32.mrf.mxu0
    %1114 = vdwg.mxu0
    %v1115 = vadd.f32 %v942, %v1093
    %v1116 = vadd.f32 %v943, %v1096
    %v1117 = vadd.f32 %v944, %v1101
    %v1118 = vadd.f32 %v945, %v1104
    %v1119 = vadd.f32 %v946, %v1109
    %v1120 = vadd.f32 %v947, %v1112
    %s1121 = scalar_lea.vmem [#allocation2], 24
    %v1122 = vld [vmem:[%s1121] sm:$0xf]
    %v1123 = vld [vmem:[%s1121 + $0x4] sm:$0xf]
    %v1124 = vld [vmem:[%s1121 + $0xc] sm:$0xf]
    %v1125 = vld [vmem:[%s1121 + $0x10] sm:$0xf]
    %v1126 = vld [vmem:[%s1121 + $0x18] sm:$0xf]
    %v1127 = vld [vmem:[%s1121 + $0x1c] sm:$0xf]
    %s1128 = scalar_lea.vmem [#allocation5], 384
    %v1129 = vld [vmem:[%s1128] sm:$0xf]
    %v1130 = vld [vmem:[%s1128 + $0x4] sm:$0xf]
    %v1131 = vld [vmem:[%s1128 + $0x8] sm:$0xf]
    %v1132 = vld [vmem:[%s1128 + $0xc] sm:$0xf]
    %v1133 = vld [vmem:[%s1128 + $0x10] sm:$0xf]
    %v1134 = vld [vmem:[%s1128 + $0x14] sm:$0xf]
    %v1135 = vld [vmem:[%s1128 + $0x18] sm:$0xf]
    %v1136 = vld [vmem:[%s1128 + $0x1c] sm:$0xf]
    %v1137 = vld [vmem:[%s1128 + $0x20] sm:$0xf]
    %v1138 = vld [vmem:[%s1128 + $0x24] sm:$0xf]
    %v1139 = vld [vmem:[%s1128 + $0x28] sm:$0xf]
    %v1140 = vld [vmem:[%s1128 + $0x2c] sm:$0xf]
    %v1141 = vld [vmem:[%s1128 + $0x30] sm:$0xf]
    %v1142 = vld [vmem:[%s1128 + $0x34] sm:$0xf]
    %v1143 = vld [vmem:[%s1128 + $0x38] sm:$0xf]
    %v1144 = vld [vmem:[%s1128 + $0x3c] sm:$0xf]
    %v1151 = vunpack.c.l.b16 %v1122
    %v1152 = vunpack.c.l.b16 %v1123
    %v1153 = vunpack.c.l.b16 %v1124
    %v1154 = vunpack.c.l.b16 %v1125
    %v1155 = vunpack.c.l.b16 %v1126
    %v1156 = vunpack.c.l.b16 %v1127
    %v1157 = vpack.c.b16 %v1152, %v1151
    %v1158 = vpack.c.b16 %v1154, %v1153
    %v1159 = vpack.c.b16 %v1156, %v1155
    %v1179 = vunpack.c.l.b16 %v1129
    %v1180 = vunpack.c.l.b16 %v1130
    %v1181 = vunpack.c.l.b16 %v1131
    %v1182 = vunpack.c.l.b16 %v1132
    %v1183 = vunpack.c.l.b16 %v1133
    %v1184 = vunpack.c.l.b16 %v1134
    %v1185 = vunpack.c.l.b16 %v1135
    %v1186 = vunpack.c.l.b16 %v1136
    %v1187 = vunpack.c.l.b16 %v1137
    %v1188 = vunpack.c.l.b16 %v1138
    %v1189 = vunpack.c.l.b16 %v1139
    %v1190 = vunpack.c.l.b16 %v1140
    %v1191 = vunpack.c.l.b16 %v1141
    %v1192 = vunpack.c.l.b16 %v1142
    %v1193 = vunpack.c.l.b16 %v1143
    %v1194 = vunpack.c.l.b16 %v1144
    %v1195 = vpack.c.b16 %v1180, %v1179
    %v1196 = vpack.c.b16 %v1182, %v1181
    %v1197 = vpack.c.b16 %v1184, %v1183
    %v1198 = vpack.c.b16 %v1186, %v1185
    %v1199 = vpack.c.b16 %v1188, %v1187
    %v1200 = vpack.c.b16 %v1190, %v1189
    %v1201 = vpack.c.b16 %v1192, %v1191
    %v1202 = vpack.c.b16 %v1194, %v1193
    %1211 = vmatprep.subr.bf16.mxu0 0
    %1212 = vmatpush1.bf16.msra.mxu0 %v1202
    %1213 = vmatprep.subr.bf16.mxu0 0
    %1214 = vmatpush1.bf16.msra.mxu0 %v1201
    %1215 = vmatprep.subr.bf16.mxu0 0
    %1216 = vmatpush1.bf16.msra.mxu0 %v1200
    %1217 = vmatprep.subr.bf16.mxu0 0
    %1218 = vmatpush1.bf16.msra.mxu0 %v1199
    %1219 = vmatprep.subr.bf16.mxu0 0
    %1220 = vmatpush1.bf16.msra.mxu0 %v1198
    %1221 = vmatprep.subr.bf16.mxu0 0
    %1222 = vmatpush1.bf16.msra.mxu0 %v1197
    %1223 = vmatprep.subr.bf16.mxu0 0
    %1224 = vmatpush1.bf16.msra.mxu0 %v1196
    %1225 = vmatprep.subr.bf16.mxu0 0
    %1226 = vmatpush1.bf16.msra.mxu0 %v1195
    %1227 = vmatprep.subr.bf16.mxu0 0
    %1228 = vmatpush2.bf16.msra.mxu0 0
    %1229 = vmatprep.subr.bf16.mxu0 0
    %1230 = vmatpush2.bf16.msra.mxu0 0
    %1231 = vmatprep.subr.bf16.mxu0 0
    %1232 = vmatpush2.bf16.msra.mxu0 0
    %1233 = vmatprep.subr.bf16.mxu0 0
    %1234 = vmatpush2.bf16.msra.mxu0 0
    %1235 = vmatprep.subr.bf16.mxu0 0
    %1236 = vmatpush2.bf16.msra.mxu0 0
    %1237 = vmatprep.subr.bf16.mxu0 0
    %1238 = vmatpush2.bf16.msra.mxu0 0
    %1239 = vmatprep.subr.bf16.mxu0 0
    %1240 = vmatpush2.bf16.msra.mxu0 0
    %1241 = vmatprep.subr.bf16.mxu0 0
    %1242 = vmatpush2.bf16.msra.mxu0 0
    %1243 = vmatprep.mubr.bf16.mxu0 0
    %1244 = vmatmul.mubr.bf16.gmra.mxu0 %v1157
    %v1245 = vpop.f32.mrf.mxu0
    %v1246 = vadd.f32 0.0, %v1245
    %v1247 = vpop.f32.mrf.mxu0
    %v1248 = vpop.f32.mrf.mxu0
    %v1249 = vadd.f32 0.0, %v1248
    %v1250 = vpop.f32.mrf.mxu0
    %1251 = vmatprep.mubr.bf16.mxu0 0
    %1252 = vmatmul.mubr.bf16.gmra.mxu0 %v1158
    %v1253 = vpop.f32.mrf.mxu0
    %v1254 = vadd.f32 0.0, %v1253
    %v1255 = vpop.f32.mrf.mxu0
    %v1256 = vpop.f32.mrf.mxu0
    %v1257 = vadd.f32 0.0, %v1256
    %v1258 = vpop.f32.mrf.mxu0
    %1259 = vmatprep.mubr.bf16.mxu0 0
    %1260 = vmatmul.mubr.bf16.gmra.mxu0 %v1159
    %v1261 = vpop.f32.mrf.mxu0
    %v1262 = vadd.f32 0.0, %v1261
    %v1263 = vpop.f32.mrf.mxu0
    %v1264 = vpop.f32.mrf.mxu0
    %v1265 = vadd.f32 0.0, %v1264
    %v1266 = vpop.f32.mrf.mxu0
    %1267 = vdwg.mxu0
    %v1268 = vadd.f32 %v1115, %v1246
    %v1269 = vadd.f32 %v1116, %v1249
    %v1270 = vadd.f32 %v1117, %v1254
    %v1271 = vadd.f32 %v1118, %v1257
    %v1272 = vadd.f32 %v1119, %v1262
    %v1273 = vadd.f32 %v1120, %v1265
    %v1274 = vld [vmem:[%s1121] sm:$0xf]
    %v1275 = vld [vmem:[%s1121 + $0x4] sm:$0xf]
    %v1276 = vld [vmem:[%s1121 + $0x8] sm:$0x1]
    %v1277 = vld [vmem:[%s1121 + $0xc] sm:$0xf]
    %v1278 = vld [vmem:[%s1121 + $0x10] sm:$0xf]
    %v1279 = vld [vmem:[%s1121 + $0x14] sm:$0x1]
    %v1280 = vld [vmem:[%s1121 + $0x18] sm:$0xf]
    %v1281 = vld [vmem:[%s1121 + $0x1c] sm:$0xf]
    %v1282 = vld [vmem:[%s1121 + $0x20] sm:$0x1]
    %v1284 = vshrl.u32 %v1274, 16
    %v1286 = vrot.slane %v1284, 4
    %v1287 = vshll.u32 %v1274, 16
    %v1289 = vrot.slane %v1287, 5
    %v1290 = vor.u32 %v1286, %v1289
    %v1291 = vrot.slane %v1290, 4
    %v1293 = vshll.u32 %v1275, 16
    %v1295 = vrot.slane %v1293, 5
    %v1296 = vsel %vm71, %v1291, %v1295
    %v1297 = vshrl.u32 %v1275, 16
    %v1299 = vrot.slane %v1297, 4
    %v1300 = vor.u32 %v1299, %v1295
    %v1301 = vrot.slane %v1300, 4
    %v1303 = vshll.u32 %v1276, 16
    %v1305 = vrot.slane %v1303, 5
    %v1306 = vsel %vm71, %v1301, %v1305
    %v1308 = vshrl.u32 %v1277, 16
    %v1310 = vrot.slane %v1308, 4
    %v1311 = vshll.u32 %v1277, 16
    %v1313 = vrot.slane %v1311, 5
    %v1314 = vor.u32 %v1310, %v1313
    %v1315 = vrot.slane %v1314, 4
    %v1317 = vshll.u32 %v1278, 16
    %v1319 = vrot.slane %v1317, 5
    %v1320 = vsel %vm71, %v1315, %v1319
    %v1321 = vshrl.u32 %v1278, 16
    %v1323 = vrot.slane %v1321, 4
    %v1324 = vor.u32 %v1323, %v1319
    %v1325 = vrot.slane %v1324, 4
    %v1327 = vshll.u32 %v1279, 16
    %v1329 = vrot.slane %v1327, 5
    %v1330 = vsel %vm71, %v1325, %v1329
    %v1332 = vshrl.u32 %v1280, 16
    %v1334 = vrot.slane %v1332, 4
    %v1335 = vshll.u32 %v1280, 16
    %v1337 = vrot.slane %v1335, 5
    %v1338 = vor.u32 %v1334, %v1337
    %v1339 = vrot.slane %v1338, 4
    %v1341 = vshll.u32 %v1281, 16
    %v1343 = vrot.slane %v1341, 5
    %v1344 = vsel %vm71, %v1339, %v1343
    %v1345 = vshrl.u32 %v1281, 16
    %v1347 = vrot.slane %v1345, 4
    %v1348 = vor.u32 %v1347, %v1343
    %v1349 = vrot.slane %v1348, 4
    %v1351 = vshll.u32 %v1282, 16
    %v1353 = vrot.slane %v1351, 5
    %v1354 = vsel %vm71, %v1349, %v1353
    %s1355 = scalar_lea.vmem [#allocation5], 448
    %v1356 = vld [vmem:[%s1355] sm:$0xf]
    %v1357 = vld [vmem:[%s1355 + $0x4] sm:$0xf]
    %v1358 = vld [vmem:[%s1355 + $0x8] sm:$0xf]
    %v1359 = vld [vmem:[%s1355 + $0xc] sm:$0xf]
    %v1360 = vld [vmem:[%s1355 + $0x10] sm:$0xf]
    %v1361 = vld [vmem:[%s1355 + $0x14] sm:$0xf]
    %v1362 = vld [vmem:[%s1355 + $0x18] sm:$0xf]
    %v1363 = vld [vmem:[%s1355 + $0x1c] sm:$0xf]
    %v1364 = vld [vmem:[%s1355 + $0x20] sm:$0xf]
    %v1365 = vld [vmem:[%s1355 + $0x24] sm:$0xf]
    %v1366 = vld [vmem:[%s1355 + $0x28] sm:$0xf]
    %v1367 = vld [vmem:[%s1355 + $0x2c] sm:$0xf]
    %v1368 = vld [vmem:[%s1355 + $0x30] sm:$0xf]
    %v1369 = vld [vmem:[%s1355 + $0x34] sm:$0xf]
    %v1370 = vld [vmem:[%s1355 + $0x38] sm:$0xf]
    %v1371 = vld [vmem:[%s1355 + $0x3c] sm:$0xf]
    %v1372 = vunpack.c.l.b16 %v1296
    %v1373 = vunpack.c.l.b16 %v1306
    %v1374 = vunpack.c.l.b16 %v1320
    %v1375 = vunpack.c.l.b16 %v1330
    %v1376 = vunpack.c.l.b16 %v1344
    %v1377 = vunpack.c.l.b16 %v1354
    %v1378 = vpack.c.b16 %v1373, %v1372
    %v1379 = vpack.c.b16 %v1375, %v1374
    %v1380 = vpack.c.b16 %v1377, %v1376
    %v1400 = vunpack.c.l.b16 %v1356
    %v1401 = vunpack.c.l.b16 %v1357
    %v1402 = vunpack.c.l.b16 %v1358
    %v1403 = vunpack.c.l.b16 %v1359
    %v1404 = vunpack.c.l.b16 %v1360
    %v1405 = vunpack.c.l.b16 %v1361
    %v1406 = vunpack.c.l.b16 %v1362
    %v1407 = vunpack.c.l.b16 %v1363
    %v1408 = vunpack.c.l.b16 %v1364
    %v1409 = vunpack.c.l.b16 %v1365
    %v1410 = vunpack.c.l.b16 %v1366
    %v1411 = vunpack.c.l.b16 %v1367
    %v1412 = vunpack.c.l.b16 %v1368
    %v1413 = vunpack.c.l.b16 %v1369
    %v1414 = vunpack.c.l.b16 %v1370
    %v1415 = vunpack.c.l.b16 %v1371
    %v1416 = vpack.c.b16 %v1401, %v1400
    %v1417 = vpack.c.b16 %v1403, %v1402
    %v1418 = vpack.c.b16 %v1405, %v1404
    %v1419 = vpack.c.b16 %v1407, %v1406
    %v1420 = vpack.c.b16 %v1409, %v1408
    %v1421 = vpack.c.b16 %v1411, %v1410
    %v1422 = vpack.c.b16 %v1413, %v1412
    %v1423 = vpack.c.b16 %v1415, %v1414
    %1432 = vmatprep.subr.bf16.mxu0 0
    %1433 = vmatpush1.bf16.msra.mxu0 %v1423
    %1434 = vmatprep.subr.bf16.mxu0 0
    %1435 = vmatpush1.bf16.msra.mxu0 %v1422
    %1436 = vmatprep.subr.bf16.mxu0 0
    %1437 = vmatpush1.bf16.msra.mxu0 %v1421
    %1438 = vmatprep.subr.bf16.mxu0 0
    %1439 = vmatpush1.bf16.msra.mxu0 %v1420
    %1440 = vmatprep.subr.bf16.mxu0 0
    %1441 = vmatpush1.bf16.msra.mxu0 %v1419
    %1442 = vmatprep.subr.bf16.mxu0 0
    %1443 = vmatpush1.bf16.msra.mxu0 %v1418
    %1444 = vmatprep.subr.bf16.mxu0 0
    %1445 = vmatpush1.bf16.msra.mxu0 %v1417
    %1446 = vmatprep.subr.bf16.mxu0 0
    %1447 = vmatpush1.bf16.msra.mxu0 %v1416
    %1448 = vmatprep.subr.bf16.mxu0 0
    %1449 = vmatpush2.bf16.msra.mxu0 0
    %1450 = vmatprep.subr.bf16.mxu0 0
    %1451 = vmatpush2.bf16.msra.mxu0 0
    %1452 = vmatprep.subr.bf16.mxu0 0
    %1453 = vmatpush2.bf16.msra.mxu0 0
    %1454 = vmatprep.subr.bf16.mxu0 0
    %1455 = vmatpush2.bf16.msra.mxu0 0
    %1456 = vmatprep.subr.bf16.mxu0 0
    %1457 = vmatpush2.bf16.msra.mxu0 0
    %1458 = vmatprep.subr.bf16.mxu0 0
    %1459 = vmatpush2.bf16.msra.mxu0 0
    %1460 = vmatprep.subr.bf16.mxu0 0
    %1461 = vmatpush2.bf16.msra.mxu0 0
    %1462 = vmatprep.subr.bf16.mxu0 0
    %1463 = vmatpush2.bf16.msra.mxu0 0
    %1464 = vmatprep.mubr.bf16.mxu0 0
    %1465 = vmatmul.mubr.bf16.gmra.mxu0 %v1378
    %v1466 = vpop.f32.mrf.mxu0
    %v1467 = vadd.f32 0.0, %v1466
    %v1468 = vpop.f32.mrf.mxu0
    %v1469 = vpop.f32.mrf.mxu0
    %v1470 = vadd.f32 0.0, %v1469
    %v1471 = vpop.f32.mrf.mxu0
    %1472 = vmatprep.mubr.bf16.mxu0 0
    %1473 = vmatmul.mubr.bf16.gmra.mxu0 %v1379
    %v1474 = vpop.f32.mrf.mxu0
    %v1475 = vadd.f32 0.0, %v1474
    %v1476 = vpop.f32.mrf.mxu0
    %v1477 = vpop.f32.mrf.mxu0
    %v1478 = vadd.f32 0.0, %v1477
    %v1479 = vpop.f32.mrf.mxu0
    %1480 = vmatprep.mubr.bf16.mxu0 0
    %1481 = vmatmul.mubr.bf16.gmra.mxu0 %v1380
    %v1482 = vpop.f32.mrf.mxu0
    %v1483 = vadd.f32 0.0, %v1482
    %v1484 = vpop.f32.mrf.mxu0
    %v1485 = vpop.f32.mrf.mxu0
    %v1486 = vadd.f32 0.0, %v1485
    %v1487 = vpop.f32.mrf.mxu0
    %1488 = vdwg.mxu0
    %v1489 = vadd.f32 %v1268, %v1467
    %v1490 = vadd.f32 %v1269, %v1470
    %v1491 = vadd.f32 %v1270, %v1475
    %v1492 = vadd.f32 %v1271, %v1478
    %v1493 = vadd.f32 %v1272, %v1483
    %v1494 = vadd.f32 %v1273, %v1486
    %v1495 = vld [vmem:[%s1121] sm:$0xe]
    %v1496 = vld [vmem:[%s1121 + $0xc] sm:$0xe]
    %v1497 = vld [vmem:[%s1121 + $0x18] sm:$0xe]
    %v1507 = vrot.slane %v1495, 5
    %v1508 = vrot.slane %v1507, 4
    %v1509 = vrot.slane %v1275, 5
    %v1510 = vsel %vm412, %v1508, %v1509
    %v1511 = vrot.slane %v1509, 4
    %v1512 = vrot.slane %v1276, 5
    %v1513 = vsel %vm412, %v1511, %v1512
    %v1514 = vrot.slane %v1496, 5
    %v1515 = vrot.slane %v1514, 4
    %v1516 = vrot.slane %v1278, 5
    %v1517 = vsel %vm412, %v1515, %v1516
    %v1518 = vrot.slane %v1516, 4
    %v1519 = vrot.slane %v1279, 5
    %v1520 = vsel %vm412, %v1518, %v1519
    %v1521 = vrot.slane %v1497, 5
    %v1522 = vrot.slane %v1521, 4
    %v1523 = vrot.slane %v1281, 5
    %v1524 = vsel %vm412, %v1522, %v1523
    %v1525 = vrot.slane %v1523, 4
    %v1526 = vrot.slane %v1282, 5
    %v1527 = vsel %vm412, %v1525, %v1526
    %s1528 = scalar_lea.vmem [#allocation5], 512
    %v1529 = vld [vmem:[%s1528] sm:$0xf]
    %v1530 = vld [vmem:[%s1528 + $0x4] sm:$0xf]
    %v1531 = vld [vmem:[%s1528 + $0x8] sm:$0xf]
    %v1532 = vld [vmem:[%s1528 + $0xc] sm:$0xf]
    %v1533 = vld [vmem:[%s1528 + $0x10] sm:$0xf]
    %v1534 = vld [vmem:[%s1528 + $0x14] sm:$0xf]
    %v1535 = vld [vmem:[%s1528 + $0x18] sm:$0xf]
    %v1536 = vld [vmem:[%s1528 + $0x1c] sm:$0xf]
    %v1537 = vld [vmem:[%s1528 + $0x20] sm:$0xf]
    %v1538 = vld [vmem:[%s1528 + $0x24] sm:$0xf]
    %v1539 = vld [vmem:[%s1528 + $0x28] sm:$0xf]
    %v1540 = vld [vmem:[%s1528 + $0x2c] sm:$0xf]
    %v1541 = vld [vmem:[%s1528 + $0x30] sm:$0xf]
    %v1542 = vld [vmem:[%s1528 + $0x34] sm:$0xf]
    %v1543 = vld [vmem:[%s1528 + $0x38] sm:$0xf]
    %v1544 = vld [vmem:[%s1528 + $0x3c] sm:$0xf]
    %v1545 = vunpack.c.l.b16 %v1510
    %v1546 = vunpack.c.l.b16 %v1513
    %v1547 = vunpack.c.l.b16 %v1517
    %v1548 = vunpack.c.l.b16 %v1520
    %v1549 = vunpack.c.l.b16 %v1524
    %v1550 = vunpack.c.l.b16 %v1527
    %v1551 = vpack.c.b16 %v1546, %v1545
    %v1552 = vpack.c.b16 %v1548, %v1547
    %v1553 = vpack.c.b16 %v1550, %v1549
    %v1573 = vunpack.c.l.b16 %v1529
    %v1574 = vunpack.c.l.b16 %v1530
    %v1575 = vunpack.c.l.b16 %v1531
    %v1576 = vunpack.c.l.b16 %v1532
    %v1577 = vunpack.c.l.b16 %v1533
    %v1578 = vunpack.c.l.b16 %v1534
    %v1579 = vunpack.c.l.b16 %v1535
    %v1580 = vunpack.c.l.b16 %v1536
    %v1581 = vunpack.c.l.b16 %v1537
    %v1582 = vunpack.c.l.b16 %v1538
    %v1583 = vunpack.c.l.b16 %v1539
    %v1584 = vunpack.c.l.b16 %v1540
    %v1585 = vunpack.c.l.b16 %v1541
    %v1586 = vunpack.c.l.b16 %v1542
    %v1587 = vunpack.c.l.b16 %v1543
    %v1588 = vunpack.c.l.b16 %v1544
    %v1589 = vpack.c.b16 %v1574, %v1573
    %v1590 = vpack.c.b16 %v1576, %v1575
    %v1591 = vpack.c.b16 %v1578, %v1577
    %v1592 = vpack.c.b16 %v1580, %v1579
    %v1593 = vpack.c.b16 %v1582, %v1581
    %v1594 = vpack.c.b16 %v1584, %v1583
    %v1595 = vpack.c.b16 %v1586, %v1585
    %v1596 = vpack.c.b16 %v1588, %v1587
    %1605 = vmatprep.subr.bf16.mxu0 0
    %1606 = vmatpush1.bf16.msra.mxu0 %v1596
    %1607 = vmatprep.subr.bf16.mxu0 0
    %1608 = vmatpush1.bf16.msra.mxu0 %v1595
    %1609 = vmatprep.subr.bf16.mxu0 0
    %1610 = vmatpush1.bf16.msra.mxu0 %v1594
    %1611 = vmatprep.subr.bf16.mxu0 0
    %1612 = vmatpush1.bf16.msra.mxu0 %v1593
    %1613 = vmatprep.subr.bf16.mxu0 0
    %1614 = vmatpush1.bf16.msra.mxu0 %v1592
    %1615 = vmatprep.subr.bf16.mxu0 0
    %1616 = vmatpush1.bf16.msra.mxu0 %v1591
    %1617 = vmatprep.subr.bf16.mxu0 0
    %1618 = vmatpush1.bf16.msra.mxu0 %v1590
    %1619 = vmatprep.subr.bf16.mxu0 0
    %1620 = vmatpush1.bf16.msra.mxu0 %v1589
    %1621 = vmatprep.subr.bf16.mxu0 0
    %1622 = vmatpush2.bf16.msra.mxu0 0
    %1623 = vmatprep.subr.bf16.mxu0 0
    %1624 = vmatpush2.bf16.msra.mxu0 0
    %1625 = vmatprep.subr.bf16.mxu0 0
    %1626 = vmatpush2.bf16.msra.mxu0 0
    %1627 = vmatprep.subr.bf16.mxu0 0
    %1628 = vmatpush2.bf16.msra.mxu0 0
    %1629 = vmatprep.subr.bf16.mxu0 0
    %1630 = vmatpush2.bf16.msra.mxu0 0
    %1631 = vmatprep.subr.bf16.mxu0 0
    %1632 = vmatpush2.bf16.msra.mxu0 0
    %1633 = vmatprep.subr.bf16.mxu0 0
    %1634 = vmatpush2.bf16.msra.mxu0 0
    %1635 = vmatprep.subr.bf16.mxu0 0
    %1636 = vmatpush2.bf16.msra.mxu0 0
    %1637 = vmatprep.mubr.bf16.mxu0 0
    %1638 = vmatmul.mubr.bf16.gmra.mxu0 %v1551
    %v1639 = vpop.f32.mrf.mxu0
    %v1640 = vadd.f32 0.0, %v1639
    %v1641 = vpop.f32.mrf.mxu0
    %v1642 = vpop.f32.mrf.mxu0
    %v1643 = vadd.f32 0.0, %v1642
    %v1644 = vpop.f32.mrf.mxu0
    %1645 = vmatprep.mubr.bf16.mxu0 0
    %1646 = vmatmul.mubr.bf16.gmra.mxu0 %v1552
    %v1647 = vpop.f32.mrf.mxu0
    %v1648 = vadd.f32 0.0, %v1647
    %v1649 = vpop.f32.mrf.mxu0
    %v1650 = vpop.f32.mrf.mxu0
    %v1651 = vadd.f32 0.0, %v1650
    %v1652 = vpop.f32.mrf.mxu0
    %1653 = vmatprep.mubr.bf16.mxu0 0
    %1654 = vmatmul.mubr.bf16.gmra.mxu0 %v1553
    %v1655 = vpop.f32.mrf.mxu0
    %v1656 = vadd.f32 0.0, %v1655
    %v1657 = vpop.f32.mrf.mxu0
    %v1658 = vpop.f32.mrf.mxu0
    %v1659 = vadd.f32 0.0, %v1658
    %v1660 = vpop.f32.mrf.mxu0
    %1661 = vdwg.mxu0
    %v1662 = vadd.f32 %v1489, %v1640
    %v1663 = vadd.f32 %v1490, %v1643
    %v1664 = vadd.f32 %v1491, %v1648
    %v1665 = vadd.f32 %v1492, %v1651
    %v1666 = vadd.f32 %v1493, %v1656
    %v1667 = vadd.f32 %v1494, %v1659
    %v1668 = vld [vmem:[%s2] sm:$0x1]
    %v1670 = vlaneseq
    %v1671 = vshrl.u32 %v1670, 7
    %v1672 = vsub.s32 0, %v1671
    %v1673 = vrot.slane %v1668, %v1672
    %v1675 = vadd.f32 %v1662, %v1673
    %v1676 = vadd.f32 %v1663, %v1673
    %v1677 = vadd.f32 %v1664, %v1673
    %v1678 = vadd.f32 %v1665, %v1673
    %v1679 = vadd.f32 %v1666, %v1673
    %v1680 = vadd.f32 %v1667, %v1673
    %v1681 = vpack.c.bf16 %v1676, %v1675
    %v1682 = vpack.c.bf16 %v1678, %v1677
    %v1683 = vpack.c.bf16 %v1680, %v1679
    %v1687 = vunpack.c.l.b16 %v1681
    %v1688 = vunpack.c.h.b16 %v1681
    %v1689 = vunpack.c.l.b16 %v1682
    %v1690 = vunpack.c.h.b16 %v1682
    %v1691 = vunpack.c.l.b16 %v1683
    %v1692 = vunpack.c.h.b16 %v1683
    %v1693 = vpack.c.b16 %v1687, %v1687
    %v1694 = vpack.c.b16 %v1688, %v1688
    %v1695 = vpack.c.b16 %v1689, %v1689
    %v1696 = vpack.c.b16 %v1690, %v1690
    %v1697 = vpack.c.b16 %v1691, %v1691
    %v1698 = vpack.c.b16 %v1692, %v1692
    %1705 = vst [vmem:[#allocation7] sm:$0xf] %v1693
    %1706 = vst [vmem:[#allocation7 + $0x4] sm:$0xf] %v1694
    %1707 = vst [vmem:[#allocation7 + $0x8] sm:$0xf] %v1695
    %1708 = vst [vmem:[#allocation7 + $0xc] sm:$0xf] %v1696
    %1709 = vst [vmem:[#allocation7 + $0x10] sm:$0xf] %v1697
    %1710 = vst [vmem:[#allocation7 + $0x14] sm:$0xf] %v1698
    // Predicated region
    $region22: #{tpu_custom_call.1} parent=1 // pred_check
      _
    $region23: #{tpu_custom_call.1} parent=1 // pred_check_branch
      %1712 = sbr.rel (0) target = $region25
    $region24: #{tpu_custom_call.1} parent=1 // pred_region
      %s1714 = ssub.s32 384, 384
      %1715 = vsyncadd [#allocation4], %s1714
      %s1716 = sshll.u32 [#allocation7], 4
      %s1717 = int_to_ptr.vmem [resolvable:$true] %s1716
      %1722 = dma.vmem_to_hbm [thread:$0]  %s1717, 384, %s3, [#allocation4], 64, 64, 4
    $region25: #{tpu_custom_call.1} parent=1 // pred_fallthru
      _
    // Predicated region
    $region26: #{tpu_custom_call.1} parent=1 // pred_check
      _
    $region27: #{tpu_custom_call.1} parent=1 // pred_check_branch
      %1724 = sbr.rel (0) target = $region29
    $region28: #{tpu_custom_call.1} parent=1 // pred_region
      %1725 = dma.done [#allocation4], 384
    $region29: #{tpu_custom_call.1} parent=1 // pred_fallthru
      _
    %1726 = vsyncpa [#allocation3], 1
    %1727 = vsyncpa [#allocation6], 1
    %1728 = vsyncpa [#allocation4], 1

</llo_original>
